<compile_context>
chip_gen: v5e
topology: v5e:2x2
jax: 0.10.0
libtpu: 0.0.40
codegen_flags: <defaults>
</compile_context>

<pallas_src>
import functools
import math

import jax
import jax.numpy as jnp
from jax.experimental import pallas as pl
from jax.experimental.pallas import tpu as pltpu


def _round_up(v, m):
    return ((v + m - 1) // m) * m


def _pick_tiles(n, tm_req, tk_req):
    """Clamp requested tiles to the 128-aligned node count and make the larger
    tile a multiple of the smaller one, so npad = round_up(n, max(tm, tk))
    (no lcm padding blow-up)."""
    n128 = _round_up(n, 128)
    tm = min(tm_req, n128)
    tk = min(tk_req, n128)
    if tk >= tm:
        tk = (tk // tm) * tm
    else:
        tm = (tm // tk) * tk
    npad = _round_up(n, max(tm, tk))
    return tm, tk, npad


# -----------------------------------------------------------------------------
# Kernel 1: feature transform  support = x @ W   (bf16 operands, f32 MXU acc)
# -----------------------------------------------------------------------------
def transform_kernel(x_ref, w_ref, out_ref):
    out_ref[...] = jnp.dot(
        x_ref[...], w_ref[...], preferred_element_type=jnp.float32
    ).astype(out_ref.dtype)


def _transform(x, w, *, tm):
    n, f = x.shape
    _, hp = w.shape
    return pl.pallas_call(
        transform_kernel,
        out_shape=jax.ShapeDtypeStruct((n, hp), jnp.bfloat16),
        grid=(n // tm,),
        in_specs=[
            pl.BlockSpec((tm, f), lambda i: (i, 0)),   # row tile of x / h
            pl.BlockSpec((f, hp), lambda i: (0, 0)),   # full weight (resident)
        ],
        out_specs=pl.BlockSpec((tm, hp), lambda i: (i, 0)),
        compiler_params=pltpu.CompilerParams(dimension_semantics=("parallel",)),
    )(x, w)


# -----------------------------------------------------------------------------
# Kernel 2: aggregation  out = epilogue(adj @ support + bias)
# grid = (row tiles [parallel], k tiles [arbitrary/reduction])
# -----------------------------------------------------------------------------
def aggregate_kernel(adj_ref, sup_ref, b_ref, out_ref, *scratch,
                     epilogue, tk, resident_support):
    # f32 output: accumulate directly into the resident out block (no scratch).
    # bf16 output: accumulate into the f32 VMEM scratch to keep precision.
    acc_ref = scratch[0] if scratch else out_ref
    k = pl.program_id(1)

    @pl.when(k == 0)
    def _():
        acc_ref[...] = jnp.zeros_like(acc_ref)

    if resident_support:
        # support is fully resident in VMEM; slice the k-th (tk, hp) panel.
        sup = sup_ref[pl.ds(pl.multiple_of(k * tk, tk), tk), :]
    else:
        sup = sup_ref[...]

    acc_ref[...] += jnp.dot(
        adj_ref[...], sup, preferred_element_type=jnp.float32
    )

    @pl.when(k == pl.num_programs(1) - 1)
    def _():
        z = acc_ref[...] + b_ref[...].astype(jnp.float32)
        out_ref[...] = epilogue(z).astype(out_ref.dtype)


def _aggregate(adj, sup, bias, epilogue, *, tm, tk, out_dtype,
               resident_support, adj_buffers=2):
    n = adj.shape[0]
    hp = sup.shape[1]

    if adj_buffers != 2:   # v7x knob: deeper buffering on the dominant stream
        adj_spec = pl.BlockSpec((tm, tk), lambda i, k: (i, k),
                                pipeline_mode=pl.Buffered(adj_buffers))
    else:
        adj_spec = pl.BlockSpec((tm, tk), lambda i, k: (i, k))

    if resident_support:
        # Constant block index -> DMA'd once per layer, resident across grid.
        sup_spec = pl.BlockSpec((n, hp), lambda i, k: (0, 0))
    else:
        sup_spec = pl.BlockSpec((tk, hp), lambda i, k: (k, 0))

    use_scratch = out_dtype != jnp.float32
    scratch_shapes = [pltpu.VMEM((tm, hp), jnp.float32)] if use_scratch else []

    return pl.pallas_call(
        functools.partial(aggregate_kernel, epilogue=epilogue, tk=tk,
                          resident_support=resident_support),
        out_shape=jax.ShapeDtypeStruct((n, hp), out_dtype),
        grid=(n // tm, n // tk),
        in_specs=[
            adj_spec,                                   # adj tile (bf16)
            sup_spec,                                   # support (resident/stream)
            pl.BlockSpec((1, hp), lambda i, k: (0, 0)), # bias (resident)
        ],
        out_specs=pl.BlockSpec((tm, hp), lambda i, k: (i, 0)),
        scratch_shapes=scratch_shapes,
        compiler_params=pltpu.CompilerParams(
            dimension_semantics=("parallel", "arbitrary")
        ),
    )(adj, sup, bias)


def _relu_epilogue(z):
    return jnp.maximum(z, 0.0)


def _make_log_softmax_epilogue(nclass):
    def _ep(z):
        col = jax.lax.broadcasted_iota(jnp.int32, z.shape, 1)
        valid = col < nclass
        zm = jnp.where(valid, z, -jnp.inf)          # mask padded class lanes
        m = jnp.max(zm, axis=1, keepdims=True)
        s = zm - m
        lse = jnp.log(jnp.sum(jnp.exp(s), axis=1, keepdims=True))
        return jnp.where(valid, s - lse, 0.0)
    return _ep


# -----------------------------------------------------------------------------
# Wrappers
# -----------------------------------------------------------------------------
def prepare_adj(adj, *, tm=1024, tk=1024):
    """One-time adj preprocessing, hoisted out of the per-forward cost:
    cast to bf16 and zero-pad so the (row, k) grid tiles evenly.
    Returns (adj_padded_bf16, tm, tk) -- reuse across forwards."""
    n = adj.shape[0]
    tm, tk, npad = _pick_tiles(n, tm, tk)
    adj_p = jnp.pad(adj.astype(jnp.bfloat16), ((0, npad - n), (0, npad - n)))
    return adj_p, tm, tk


@functools.partial(
    jax.jit, static_argnames=("num_nodes", "tm", "tk", "adj_buffers"))
def gcn_forward(x, adj_p, w1, b1, w2, b2, *, num_nodes, tm, tk, adj_buffers=2):
    """GCN forward pass (eval mode):
         h   = relu(adj @ (x @ W1) + b1)
         h   = dropout(h)                    # eval mode -> identity
         z   = adj @ (h @ W2) + b2
         out = log_softmax(z, axis=1)
    adj_p must come from prepare_adj() (bf16, padded)."""
    n = num_nodes
    npad = adj_p.shape[0]
    nhid = w1.shape[1]
    nclass = w2.shape[1]
    hpad = _round_up(nhid, 128)
    cpad = _round_up(nclass, 128)

    # Keep support resident in VMEM (DMA'd once per layer) whenever the whole
    # aggregate footprint -- support (possibly double-buffered), adj double
    # buffer at tm x tk bf16, output buffers -- fits v5e's 16 MiB scoped-VMEM
    # default. Larger graphs fall back to streaming support per k tile.
    sup_bytes = npad * max(hpad, cpad) * 2          # bf16
    resident_support = sup_bytes <= 4 * 1024 * 1024

    x_p = jnp.pad(x.astype(jnp.bfloat16), ((0, npad - n), (0, 0)))
    w1_p = jnp.pad(w1.astype(jnp.bfloat16), ((0, 0), (0, hpad - nhid)))
    b1_p = jnp.pad(jnp.reshape(b1, (1, -1)).astype(jnp.float32),
                   ((0, 0), (0, hpad - nhid)))
    w2_p = jnp.pad(w2.astype(jnp.bfloat16),
                   ((0, hpad - nhid), (0, cpad - nclass)))
    b2_p = jnp.pad(jnp.reshape(b2, (1, -1)).astype(jnp.float32),
                   ((0, 0), (0, cpad - nclass)))

    # Layer 1: support1 = x @ W1 (once), h = relu(adj @ support1 + b1), bf16.
    support1 = _transform(x_p, w1_p, tm=tm)
    h = _aggregate(adj_p, support1, b1_p, _relu_epilogue, tm=tm, tk=tk,
                   out_dtype=jnp.bfloat16, resident_support=resident_support,
                   adj_buffers=adj_buffers)

    # TODO(synk): dropout is a no-op in eval mode; training mode would need
    # pltpu.prng_seed / pltpu.prng_random_bits masking here.

    # Layer 2: support2 = h @ W2 (once), z = adj @ support2 + b2, log_softmax.
    out_p = _aggregate(adj_p, _transform(h, w2_p, tm=tm), b2_p,
                       _make_log_softmax_epilogue(nclass), tm=tm, tk=tk,
                       out_dtype=jnp.float32,
                       resident_support=resident_support,
                       adj_buffers=adj_buffers)

    return out_p[:n, :nclass]


def init_gcn_params(key, nfeat, nhid, nclass):
    """Matches GraphConvolution.reset_parameters:
    uniform(-stdv, stdv), stdv = 1/sqrt(out_features)."""
    k1, k2, k3, k4 = jax.random.split(key, 4)
    stdv1 = 1.0 / math.sqrt(nhid)
    stdv2 = 1.0 / math.sqrt(nclass)
    w1 = jax.random.uniform(k1, (nfeat, nhid), jnp.float32, -stdv1, stdv1)
    b1 = jax.random.uniform(k2, (nhid,), jnp.float32, -stdv1, stdv1)
    w2 = jax.random.uniform(k3, (nhid, nclass), jnp.float32, -stdv2, stdv2)
    b2 = jax.random.uniform(k4, (nclass,), jnp.float32, -stdv2, stdv2)
    return w1, b1, w2, b2


if __name__ == "__main__":
    # Small shapes: N=256 nodes, nfeat=16, nhid=32, nclass=8.
    N, NFEAT, NHID, NCLASS = 256, 16, 32, 8
    key = jax.random.PRNGKey(0)
    kx, kadj, kp = jax.random.split(key, 3)

    x = jax.random.normal(kx, (N, NFEAT), jnp.float32)

    # Symmetric, row-normalized dense adjacency (typical GCN preprocessing).
    a = (jax.random.uniform(kadj, (N, N)) > 0.9).astype(jnp.float32)
    a = jnp.maximum(a, a.T) + jnp.eye(N, dtype=jnp.float32)
    adj = a / jnp.sum(a, axis=1, keepdims=True)

    w1, b1, w2, b2 = init_gcn_params(kp, NFEAT, NHID, NCLASS)

    # adj cast + pad done ONCE (hoisted out of the forward); tiles are clamped
    # to the graph size (here 256) so the demo pads nothing.
    adj_p, tm, tk = prepare_adj(adj, tm=1024, tk=1024)

    out = gcn_forward(x, adj_p, w1, b1, w2, b2, num_nodes=N, tm=tm, tk=tk)
    jax.block_until_ready(out)

    # Plain-JAX f32 reference; kernel uses bf16 matmul operands with f32
    # accumulation, so allow a modest tolerance.
    h_ref = jnp.maximum(adj @ (x @ w1) + b1[None, :], 0.0)
    z_ref = adj @ (h_ref @ w2) + b2[None, :]
    ref = jax.nn.log_softmax(z_ref, axis=1)

    assert out.shape == (N, NCLASS)
    err = float(jnp.max(jnp.abs(out - ref)))
    assert err < 2e-2, f"mismatch vs reference: max abs err = {err}"

    print("KERNEL_OK")
</pallas_src>

<mosaic_0001>
module attributes {stable_mosaic.version = 11 : i64} {
  func.func @transform_kernel(%arg0: i32, %arg1: memref<256x16xbf16, #tpu.memory_space<vmem>>, %arg2: memref<16x128xbf16, #tpu.memory_space<vmem>>, %arg3: memref<256x128xbf16, #tpu.memory_space<vmem>>) attributes {dimension_semantics = [#tpu.dimension_semantics<parallel>], iteration_bounds = array<i64: 1>, scalar_prefetch = 0 : i64, scratch_operands = 0 : i64, tpu.core_type = #tpu.core_type<tc>, window_params = [{transform_indices = @transform_0, window_bounds = array<i64: 256, 16>}, {pipeline_mode = #tpu.pipeline_mode<synchronous>, transform_indices = @transform_1, window_bounds = array<i64: 16, 128>}, {transform_indices = @transform_2, window_bounds = array<i64: 256, 128>}]} {
    %c0 = arith.constant 0 : index
    %c0_0 = arith.constant 0 : index
    %0 = vector.load %arg1[%c0, %c0_0] : memref<256x16xbf16, #tpu.memory_space<vmem>>, vector<256x16xbf16>
    %c0_1 = arith.constant 0 : index
    %c0_2 = arith.constant 0 : index
    %1 = vector.load %arg2[%c0_1, %c0_2] : memref<16x128xbf16, #tpu.memory_space<vmem>>, vector<16x128xbf16>
    %cst = arith.constant dense<0.000000e+00> : vector<256x128xf32>
    %2 = tpu.matmul %0, %1, %cst {dimension_numbers = #tpu.dot_dimension_numbers<[1], [0], [0], [1], [0, 0, 1, 1], [], []>} : vector<256x16xbf16>, vector<16x128xbf16>, vector<256x128xf32> -> vector<256x128xf32>
    %3 = arith.truncf %2 : vector<256x128xf32> to vector<256x128xbf16>
    %c0_3 = arith.constant 0 : index
    %c0_4 = arith.constant 0 : index
    %4 = vector.load %arg3[%c0_3, %c0_4] : memref<256x128xbf16, #tpu.memory_space<vmem>>, vector<256x128xbf16>
    tpu.vector_store %arg3[%c0_3, %c0_4], %3 {strides = array<i32>} : memref<256x128xbf16, #tpu.memory_space<vmem>>, vector<256x128xbf16>,
    return
  }
  func.func @transform_0(%arg0: i32) -> (i32, i32) {
    %c0_i32 = arith.constant 0 : i32
    %c0_i32_0 = arith.constant 0 : i32
    return %arg0, %c0_i32 : i32, i32
  }
  func.func @transform_1(%arg0: i32) -> (i32, i32) {
    %c0_i32 = arith.constant 0 : i32
    %c0_i32_0 = arith.constant 0 : i32
    %c0_i32_1 = arith.constant 0 : i32
    return %c0_i32, %c0_i32_0 : i32, i32
  }
  func.func @transform_2(%arg0: i32) -> (i32, i32) {
    %c0_i32 = arith.constant 0 : i32
    %c0_i32_0 = arith.constant 0 : i32
    return %arg0, %c0_i32 : i32, i32
  }
}

module attributes {stable_mosaic.version = 11 : i64} {
  func.func @transform_kernel(%arg0: i32, %arg1: memref<256x128xbf16, #tpu.memory_space<vmem>>, %arg2: memref<128x128xbf16, #tpu.memory_space<vmem>>, %arg3: memref<256x128xbf16, #tpu.memory_space<vmem>>) attributes {dimension_semantics = [#tpu.dimension_semantics<parallel>], iteration_bounds = array<i64: 1>, scalar_prefetch = 0 : i64, scratch_operands = 0 : i64, tpu.core_type = #tpu.core_type<tc>, window_params = [{transform_indices = @transform_0, window_bounds = array<i64: 256, 128>}, {pipeline_mode = #tpu.pipeline_mode<synchronous>, transform_indices = @transform_1, window_bounds = array<i64: 128, 128>}, {transform_indices = @transform_2, window_bounds = array<i64: 256, 128>}]} {
    %c0 = arith.constant 0 : index
    %c0_0 = arith.constant 0 : index
    %0 = vector.load %arg1[%c0, %c0_0] : memref<256x128xbf16, #tpu.memory_space<vmem>>, vector<256x128xbf16>
    %c0_1 = arith.constant 0 : index
    %c0_2 = arith.constant 0 : index
    %1 = vector.load %arg2[%c0_1, %c0_2] : memref<128x128xbf16, #tpu.memory_space<vmem>>, vector<128x128xbf16>
    %cst = arith.constant dense<0.000000e+00> : vector<256x128xf32>
    %2 = tpu.matmul %0, %1, %cst {dimension_numbers = #tpu.dot_dimension_numbers<[1], [0], [0], [1], [0, 0, 1, 1], [], []>} : vector<256x128xbf16>, vector<128x128xbf16>, vector<256x128xf32> -> vector<256x128xf32>
    %3 = arith.truncf %2 : vector<256x128xf32> to vector<256x128xbf16>
    %c0_3 = arith.constant 0 : index
    %c0_4 = arith.constant 0 : index
    %4 = vector.load %arg3[%c0_3, %c0_4] : memref<256x128xbf16, #tpu.memory_space<vmem>>, vector<256x128xbf16>
    tpu.vector_store %arg3[%c0_3, %c0_4], %3 {strides = array<i32>} : memref<256x128xbf16, #tpu.memory_space<vmem>>, vector<256x128xbf16>,
    return
  }
  func.func @transform_0(%arg0: i32) -> (i32, i32) {
    %c0_i32 = arith.constant 0 : i32
    %c0_i32_0 = arith.constant 0 : i32
    return %arg0, %c0_i32 : i32, i32
  }
  func.func @transform_1(%arg0: i32) -> (i32, i32) {
    %c0_i32 = arith.constant 0 : i32
    %c0_i32_0 = arith.constant 0 : i32
    %c0_i32_1 = arith.constant 0 : i32
    return %c0_i32, %c0_i32_0 : i32, i32
  }
  func.func @transform_2(%arg0: i32) -> (i32, i32) {
    %c0_i32 = arith.constant 0 : i32
    %c0_i32_0 = arith.constant 0 : i32
    return %arg0, %c0_i32 : i32, i32
  }
}

module attributes {stable_mosaic.version = 11 : i64} {
  func.func @aggregate_kernel(%arg0: i32, %arg1: i32, %arg2: memref<256x256xbf16, #tpu.memory_space<vmem>>, %arg3: memref<256x128xbf16, #tpu.memory_space<vmem>>, %arg4: memref<1x128xf32, #tpu.memory_space<vmem>>, %arg5: memref<256x128xbf16, #tpu.memory_space<vmem>>, %arg6: memref<256x128xf32, #tpu.memory_space<vmem>>) attributes {dimension_semantics = [#tpu.dimension_semantics<parallel>, #tpu.dimension_semantics<arbitrary>], iteration_bounds = array<i64: 1, 1>, scalar_prefetch = 0 : i64, scratch_operands = 1 : i64, tpu.core_type = #tpu.core_type<tc>, window_params = [{transform_indices = @transform_0, window_bounds = array<i64: 256, 256>}, {pipeline_mode = #tpu.pipeline_mode<synchronous>, transform_indices = @transform_1, window_bounds = array<i64: 256, 128>}, {pipeline_mode = #tpu.pipeline_mode<synchronous>, transform_indices = @transform_2, window_bounds = array<i64: 1, 128>}, {transform_indices = @transform_3, window_bounds = array<i64: 256, 128>}]} {
    %c0_i32 = arith.constant 0 : i32
    %0 = arith.cmpi eq, %arg1, %c0_i32 : i32
    %1 = arith.extui %0 : i1 to i32
    %c0_i32_0 = arith.constant 0 : i32
    %2 = arith.cmpi ne, %1, %c0_i32_0 : i32
    scf.if %2 {
      %cst_9 = arith.constant 0.000000e+00 : f32
      %15 = vector.broadcast %cst_9 : f32 to vector<256x128xf32>
      %c0_10 = arith.constant 0 : index
      %c0_11 = arith.constant 0 : index
      %16 = vector.load %arg6[%c0_10, %c0_11] : memref<256x128xf32, #tpu.memory_space<vmem>>, vector<256x128xf32>
      tpu.vector_store %arg6[%c0_10, %c0_11], %15 {strides = array<i32>} : memref<256x128xf32, #tpu.memory_space<vmem>>, vector<256x128xf32>,
    } else {
    }
    %c256_i32 = arith.constant 256 : i32
    %3 = arith.muli %arg1, %c256_i32 : i32
    %4 = tpu.assume_multiple %3, 256 : i32
    %5 = arith.index_cast %4 : i32 to index
    %c0 = arith.constant 0 : index
    %6 = vector.load %arg3[%5, %c0] : memref<256x128xbf16, #tpu.memory_space<vmem>>, vector<256x128xbf16>
    %c0_1 = arith.constant 0 : index
    %c0_2 = arith.constant 0 : index
    %7 = vector.load %arg6[%c0_1, %c0_2] : memref<256x128xf32, #tpu.memory_space<vmem>>, vector<256x128xf32>
    %c0_3 = arith.constant 0 : index
    %c0_4 = arith.constant 0 : index
    %8 = vector.load %arg2[%c0_3, %c0_4] : memref<256x256xbf16, #tpu.memory_space<vmem>>, vector<256x256xbf16>
    %cst = arith.constant dense<0.000000e+00> : vector<256x128xf32>
    %9 = tpu.matmul %8, %6, %cst {dimension_numbers = #tpu.dot_dimension_numbers<[1], [0], [0], [1], [0, 0, 1, 1], [], []>} : vector<256x256xbf16>, vector<256x128xbf16>, vector<256x128xf32> -> vector<256x128xf32>
    %10 = arith.addf %7, %9 : vector<256x128xf32>
    %c0_5 = arith.constant 0 : index
    %c0_6 = arith.constant 0 : index
    %11 = vector.load %arg6[%c0_5, %c0_6] : memref<256x128xf32, #tpu.memory_space<vmem>>, vector<256x128xf32>
    tpu.vector_store %arg6[%c0_5, %c0_6], %10 {strides = array<i32>} : memref<256x128xf32, #tpu.memory_space<vmem>>, vector<256x128xf32>,
    %c0_i32_7 = arith.constant 0 : i32
    %12 = arith.cmpi eq, %arg1, %c0_i32_7 : i32
    %13 = arith.extui %12 : i1 to i32
    %c0_i32_8 = arith.constant 0 : i32
    %14 = arith.cmpi ne, %13, %c0_i32_8 : i32
    scf.if %14 {
      %c0_9 = arith.constant 0 : index
      %c0_10 = arith.constant 0 : index
      %15 = vector.load %arg6[%c0_9, %c0_10] : memref<256x128xf32, #tpu.memory_space<vmem>>, vector<256x128xf32>
      %c0_11 = arith.constant 0 : index
      %c0_12 = arith.constant 0 : index
      %16 = vector.load %arg4[%c0_11, %c0_12] : memref<1x128xf32, #tpu.memory_space<vmem>>, vector<1x128xf32>
      %17 = vector.broadcast %16 : vector<1x128xf32> to vector<256x128xf32>
      %18 = arith.addf %15, %17 : vector<256x128xf32>
      %cst_13 = arith.constant 0.000000e+00 : f32
      %19 = vector.broadcast %cst_13 : f32 to vector<256x128xf32>
      %20 = arith.maximumf %18, %19 : vector<256x128xf32>
      %21 = arith.truncf %20 : vector<256x128xf32> to vector<256x128xbf16>
      %c0_14 = arith.constant 0 : index
      %c0_15 = arith.constant 0 : index
      %22 = vector.load %arg5[%c0_14, %c0_15] : memref<256x128xbf16, #tpu.memory_space<vmem>>, vector<256x128xbf16>
      tpu.vector_store %arg5[%c0_14, %c0_15], %21 {strides = array<i32>} : memref<256x128xbf16, #tpu.memory_space<vmem>>, vector<256x128xbf16>,
    } else {
    }
    return
  }
  func.func @transform_0(%arg0: i32, %arg1: i32) -> (i32, i32) {
    %c0_i32 = arith.constant 0 : i32
    return %arg0, %arg1 : i32, i32
  }
  func.func @transform_1(%arg0: i32, %arg1: i32) -> (i32, i32) {
    %c0_i32 = arith.constant 0 : i32
    %c0_i32_0 = arith.constant 0 : i32
    %c0_i32_1 = arith.constant 0 : i32
    return %c0_i32, %c0_i32_0 : i32, i32
  }
  func.func @transform_2(%arg0: i32, %arg1: i32) -> (i32, i32) {
    %c0_i32 = arith.constant 0 : i32
    %c0_i32_0 = arith.constant 0 : i32
    %c0_i32_1 = arith.constant 0 : i32
    return %c0_i32, %c0_i32_0 : i32, i32
  }
  func.func @transform_3(%arg0: i32, %arg1: i32) -> (i32, i32) {
    %c0_i32 = arith.constant 0 : i32
    %c0_i32_0 = arith.constant 0 : i32
    return %arg0, %c0_i32 : i32, i32
  }
}

module attributes {stable_mosaic.version = 11 : i64} {
  func.func @aggregate_kernel(%arg0: i32, %arg1: i32, %arg2: memref<256x256xbf16, #tpu.memory_space<vmem>>, %arg3: memref<256x128xbf16, #tpu.memory_space<vmem>>, %arg4: memref<1x128xf32, #tpu.memory_space<vmem>>, %arg5: memref<256x128xf32, #tpu.memory_space<vmem>>) attributes {dimension_semantics = [#tpu.dimension_semantics<parallel>, #tpu.dimension_semantics<arbitrary>], iteration_bounds = array<i64: 1, 1>, scalar_prefetch = 0 : i64, scratch_operands = 0 : i64, tpu.core_type = #tpu.core_type<tc>, window_params = [{transform_indices = @transform_0, window_bounds = array<i64: 256, 256>}, {pipeline_mode = #tpu.pipeline_mode<synchronous>, transform_indices = @transform_1, window_bounds = array<i64: 256, 128>}, {pipeline_mode = #tpu.pipeline_mode<synchronous>, transform_indices = @transform_2, window_bounds = array<i64: 1, 128>}, {transform_indices = @transform_3, window_bounds = array<i64: 256, 128>}]} {
    %c0_i32 = arith.constant 0 : i32
    %0 = arith.cmpi eq, %arg1, %c0_i32 : i32
    %1 = arith.extui %0 : i1 to i32
    %c0_i32_0 = arith.constant 0 : i32
    %2 = arith.cmpi ne, %1, %c0_i32_0 : i32
    scf.if %2 {
      %cst_9 = arith.constant 0.000000e+00 : f32
      %15 = vector.broadcast %cst_9 : f32 to vector<256x128xf32>
      %c0_10 = arith.constant 0 : index
      %c0_11 = arith.constant 0 : index
      %16 = vector.load %arg5[%c0_10, %c0_11] : memref<256x128xf32, #tpu.memory_space<vmem>>, vector<256x128xf32>
      tpu.vector_store %arg5[%c0_10, %c0_11], %15 {strides = array<i32>} : memref<256x128xf32, #tpu.memory_space<vmem>>, vector<256x128xf32>,
    } else {
    }
    %c256_i32 = arith.constant 256 : i32
    %3 = arith.muli %arg1, %c256_i32 : i32
    %4 = tpu.assume_multiple %3, 256 : i32
    %5 = arith.index_cast %4 : i32 to index
    %c0 = arith.constant 0 : index
    %6 = vector.load %arg3[%5, %c0] : memref<256x128xbf16, #tpu.memory_space<vmem>>, vector<256x128xbf16>
    %c0_1 = arith.constant 0 : index
    %c0_2 = arith.constant 0 : index
    %7 = vector.load %arg5[%c0_1, %c0_2] : memref<256x128xf32, #tpu.memory_space<vmem>>, vector<256x128xf32>
    %c0_3 = arith.constant 0 : index
    %c0_4 = arith.constant 0 : index
    %8 = vector.load %arg2[%c0_3, %c0_4] : memref<256x256xbf16, #tpu.memory_space<vmem>>, vector<256x256xbf16>
    %cst = arith.constant dense<0.000000e+00> : vector<256x128xf32>
    %9 = tpu.matmul %8, %6, %cst {dimension_numbers = #tpu.dot_dimension_numbers<[1], [0], [0], [1], [0, 0, 1, 1], [], []>} : vector<256x256xbf16>, vector<256x128xbf16>, vector<256x128xf32> -> vector<256x128xf32>
    %10 = arith.addf %7, %9 : vector<256x128xf32>
    %c0_5 = arith.constant 0 : index
    %c0_6 = arith.constant 0 : index
    %11 = vector.load %arg5[%c0_5, %c0_6] : memref<256x128xf32, #tpu.memory_space<vmem>>, vector<256x128xf32>
    tpu.vector_store %arg5[%c0_5, %c0_6], %10 {strides = array<i32>} : memref<256x128xf32, #tpu.memory_space<vmem>>, vector<256x128xf32>,
    %c0_i32_7 = arith.constant 0 : i32
    %12 = arith.cmpi eq, %arg1, %c0_i32_7 : i32
    %13 = arith.extui %12 : i1 to i32
    %c0_i32_8 = arith.constant 0 : i32
    %14 = arith.cmpi ne, %13, %c0_i32_8 : i32
    scf.if %14 {
      %c0_9 = arith.constant 0 : index
      %c0_10 = arith.constant 0 : index
      %15 = vector.load %arg5[%c0_9, %c0_10] : memref<256x128xf32, #tpu.memory_space<vmem>>, vector<256x128xf32>
      %c0_11 = arith.constant 0 : index
      %c0_12 = arith.constant 0 : index
      %16 = vector.load %arg4[%c0_11, %c0_12] : memref<1x128xf32, #tpu.memory_space<vmem>>, vector<1x128xf32>
      %17 = vector.broadcast %16 : vector<1x128xf32> to vector<256x128xf32>
      %18 = arith.addf %15, %17 : vector<256x128xf32>
      %19 = tpu.iota {dimensions = array<i32: 1>} : vector<256x128xi32>
      %c8_i32 = arith.constant 8 : i32
      %20 = vector.broadcast %c8_i32 : i32 to vector<256x128xi32>
      %21 = arith.cmpi slt, %19, %20 : vector<256x128xi32>
      %cst_13 = arith.constant 0xFF800000 : f32
      %22 = vector.broadcast %cst_13 : f32 to vector<256x128xf32>
      %23 = arith.select %21, %18, %22 : vector<256x128xi1>, vector<256x128xf32>
      %cst_14 = arith.constant dense<0xFF800000> : vector<256xf32>
      %24 = vector.multi_reduction <maximumf>, %23, %cst_14 [1] : vector<256x128xf32> to vector<256xf32>
      %25 = vector.shape_cast %24 : vector<256xf32> to vector<256x1xf32>
      %26 = vector.broadcast %25 : vector<256x1xf32> to vector<256x128xf32>
      %27 = arith.subf %23, %26 : vector<256x128xf32>
      %28 = math.exp %27 : vector<256x128xf32>
      %cst_15 = arith.constant dense<0.000000e+00> : vector<256xf32>
      %29 = vector.multi_reduction <add>, %28, %cst_15 [1] : vector<256x128xf32> to vector<256xf32>
      %30 = vector.shape_cast %29 : vector<256xf32> to vector<256x1xf32>
      %31 = math.log %30 : vector<256x1xf32>
      %32 = vector.broadcast %31 : vector<256x1xf32> to vector<256x128xf32>
      %33 = arith.subf %27, %32 : vector<256x128xf32>
      %cst_16 = arith.constant 0.000000e+00 : f32
      %34 = vector.broadcast %cst_16 : f32 to vector<256x128xf32>
      %35 = arith.select %21, %33, %34 : vector<256x128xi1>, vector<256x128xf32>
      %c0_17 = arith.constant 0 : index
      %c0_18 = arith.constant 0 : index
      %36 = vector.load %arg5[%c0_17, %c0_18] : memref<256x128xf32, #tpu.memory_space<vmem>>, vector<256x128xf32>
      tpu.vector_store %arg5[%c0_17, %c0_18], %35 {strides = array<i32>} : memref<256x128xf32, #tpu.memory_space<vmem>>, vector<256x128xf32>,
    } else {
    }
    return
  }
  func.func @transform_0(%arg0: i32, %arg1: i32) -> (i32, i32) {
    %c0_i32 = arith.constant 0 : i32
    return %arg0, %arg1 : i32, i32
  }
  func.func @transform_1(%arg0: i32, %arg1: i32) -> (i32, i32) {
    %c0_i32 = arith.constant 0 : i32
    %c0_i32_0 = arith.constant 0 : i32
    %c0_i32_1 = arith.constant 0 : i32
    return %c0_i32, %c0_i32_0 : i32, i32
  }
  func.func @transform_2(%arg0: i32, %arg1: i32) -> (i32, i32) {
    %c0_i32 = arith.constant 0 : i32
    %c0_i32_0 = arith.constant 0 : i32
    %c0_i32_1 = arith.constant 0 : i32
    return %c0_i32, %c0_i32_0 : i32, i32
  }
  func.func @transform_3(%arg0: i32, %arg1: i32) -> (i32, i32) {
    %c0_i32 = arith.constant 0 : i32
    %c0_i32_0 = arith.constant 0 : i32
    return %arg0, %c0_i32 : i32, i32
  }
}

</mosaic_0001>

<llo_original>
// kernel: gcn_forward.6
$region0: #{gcn_forward.6}
  #allocation0 [shape = 'u32[]', space=smem, size = 0x4, offset = 0x4, fixed_abs, tag = 'smem constant byte address 0x4 - core index']
  #allocation1 [shape = 'u32[72,128]{1,0:T(1,128)}', space=vmem, size = 0x9000, scoped, tag = 'internal scratch']
  %s0 = inlined_call_operand.vmem [shape: bf16[256,128], index: 0, kind: input, shape index: {}]
  %s1 = inlined_call_operand.vmem [shape: bf16[128,128], index: 1, kind: input, shape index: {}]
  %s2 = inlined_call_operand.vmem [shape: bf16[256,128], index: 2, kind: output, shape index: {}]
  %s3 = sld [smem:[#allocation0]]
  $region18: #{gcn_forward.6} parent=0
    _
  %s5 = ssub.s32 1, %s3
  %s6 = scalar_select 0, %s5, %s3
  // Predicated region
  $region2: #{gcn_forward.6} parent=0 // pred_check
    _
  $region3: #{gcn_forward.6} parent=0 // pred_check_branch
    %8 = sbr.rel (0) target = $region5
  $region4: #{gcn_forward.6} parent=0 // pred_region
    _
  $region5: #{gcn_forward.6} parent=0 // pred_fallthru
    _
  // Predicated region
  $region6: #{gcn_forward.6} parent=0 // pred_check
    _
  $region7: #{gcn_forward.6} parent=0 // pred_check_branch
    %10 = sbr.rel (0) target = $region9
  $region8: #{gcn_forward.6} parent=0 // pred_region
    _
  $region9: #{gcn_forward.6} parent=0 // pred_fallthru
    _
  %v11 = vld [vmem:[%s0] sm:$0xf]
  %v12 = vld [vmem:[%s0 + $0x4] sm:$0xf]
  %v13 = vld [vmem:[%s0 + $0x8] sm:$0xf]
  %v14 = vld [vmem:[%s0 + $0xc] sm:$0xf]
  %v15 = vld [vmem:[%s0 + $0x10] sm:$0xf]
  %v16 = vld [vmem:[%s0 + $0x14] sm:$0xf]
  %v17 = vld [vmem:[%s0 + $0x18] sm:$0xf]
  %v18 = vld [vmem:[%s0 + $0x1c] sm:$0xf]
  %v19 = vld [vmem:[%s0 + $0x20] sm:$0xf]
  %v20 = vld [vmem:[%s0 + $0x24] sm:$0xf]
  %v21 = vld [vmem:[%s0 + $0x28] sm:$0xf]
  %v22 = vld [vmem:[%s0 + $0x2c] sm:$0xf]
  %v23 = vld [vmem:[%s0 + $0x30] sm:$0xf]
  %v24 = vld [vmem:[%s0 + $0x34] sm:$0xf]
  %v25 = vld [vmem:[%s0 + $0x38] sm:$0xf]
  %v26 = vld [vmem:[%s0 + $0x3c] sm:$0xf]
  %v27 = vld [vmem:[%s0 + $0x40] sm:$0xf]
  %v28 = vld [vmem:[%s0 + $0x44] sm:$0xf]
  %v29 = vld [vmem:[%s0 + $0x48] sm:$0xf]
  %v30 = vld [vmem:[%s0 + $0x4c] sm:$0xf]
  %v31 = vld [vmem:[%s0 + $0x50] sm:$0xf]
  %v32 = vld [vmem:[%s0 + $0x54] sm:$0xf]
  %v33 = vld [vmem:[%s0 + $0x58] sm:$0xf]
  %v34 = vld [vmem:[%s0 + $0x5c] sm:$0xf]
  %v35 = vld [vmem:[%s0 + $0x60] sm:$0xf]
  %v36 = vld [vmem:[%s0 + $0x64] sm:$0xf]
  %v37 = vld [vmem:[%s0 + $0x68] sm:$0xf]
  %v38 = vld [vmem:[%s0 + $0x6c] sm:$0xf]
  %v39 = vld [vmem:[%s0 + $0x70] sm:$0xf]
  %v40 = vld [vmem:[%s0 + $0x74] sm:$0xf]
  %v41 = vld [vmem:[%s0 + $0x78] sm:$0xf]
  %v42 = vld [vmem:[%s0 + $0x7c] sm:$0xf]
  %v43 = vld [vmem:[%s1] sm:$0xf]
  %v44 = vld [vmem:[%s1 + $0x4] sm:$0xf]
  %v45 = vld [vmem:[%s1 + $0x8] sm:$0xf]
  %v46 = vld [vmem:[%s1 + $0xc] sm:$0xf]
  %v47 = vld [vmem:[%s1 + $0x10] sm:$0xf]
  %v48 = vld [vmem:[%s1 + $0x14] sm:$0xf]
  %v49 = vld [vmem:[%s1 + $0x18] sm:$0xf]
  %v50 = vld [vmem:[%s1 + $0x1c] sm:$0xf]
  %v51 = vld [vmem:[%s1 + $0x20] sm:$0xf]
  %v52 = vld [vmem:[%s1 + $0x24] sm:$0xf]
  %v53 = vld [vmem:[%s1 + $0x28] sm:$0xf]
  %v54 = vld [vmem:[%s1 + $0x2c] sm:$0xf]
  %v55 = vld [vmem:[%s1 + $0x30] sm:$0xf]
  %v56 = vld [vmem:[%s1 + $0x34] sm:$0xf]
  %v57 = vld [vmem:[%s1 + $0x38] sm:$0xf]
  %v58 = vld [vmem:[%s1 + $0x3c] sm:$0xf]
  %v91 = vunpack.c.l.b16 %v11
  %v92 = vunpack.c.l.b16 %v12
  %v93 = vunpack.c.l.b16 %v13
  %v94 = vunpack.c.l.b16 %v14
  %v95 = vunpack.c.l.b16 %v15
  %v96 = vunpack.c.l.b16 %v16
  %v97 = vunpack.c.l.b16 %v17
  %v98 = vunpack.c.l.b16 %v18
  %v99 = vunpack.c.l.b16 %v19
  %v100 = vunpack.c.l.b16 %v20
  %v101 = vunpack.c.l.b16 %v21
  %v102 = vunpack.c.l.b16 %v22
  %v103 = vunpack.c.l.b16 %v23
  %v104 = vunpack.c.l.b16 %v24
  %v105 = vunpack.c.l.b16 %v25
  %v106 = vunpack.c.l.b16 %v26
  %v107 = vunpack.c.l.b16 %v27
  %v108 = vunpack.c.l.b16 %v28
  %v109 = vunpack.c.l.b16 %v29
  %v110 = vunpack.c.l.b16 %v30
  %v111 = vunpack.c.l.b16 %v31
  %v112 = vunpack.c.l.b16 %v32
  %v113 = vunpack.c.l.b16 %v33
  %v114 = vunpack.c.l.b16 %v34
  %v115 = vunpack.c.l.b16 %v35
  %v116 = vunpack.c.l.b16 %v36
  %v117 = vunpack.c.l.b16 %v37
  %v118 = vunpack.c.l.b16 %v38
  %v119 = vunpack.c.l.b16 %v39
  %v120 = vunpack.c.l.b16 %v40
  %v121 = vunpack.c.l.b16 %v41
  %v122 = vunpack.c.l.b16 %v42
  %v123 = vpack.c.b16 %v92, %v91
  %v124 = vpack.c.b16 %v94, %v93
  %v125 = vpack.c.b16 %v96, %v95
  %v126 = vpack.c.b16 %v98, %v97
  %v127 = vpack.c.b16 %v100, %v99
  %v128 = vpack.c.b16 %v102, %v101
  %v129 = vpack.c.b16 %v104, %v103
  %v130 = vpack.c.b16 %v106, %v105
  %v131 = vpack.c.b16 %v108, %v107
  %v132 = vpack.c.b16 %v110, %v109
  %v133 = vpack.c.b16 %v112, %v111
  %v134 = vpack.c.b16 %v114, %v113
  %v135 = vpack.c.b16 %v116, %v115
  %v136 = vpack.c.b16 %v118, %v117
  %v137 = vpack.c.b16 %v120, %v119
  %v138 = vpack.c.b16 %v122, %v121
  %v171 = vunpack.c.l.b16 %v43
  %v172 = vunpack.c.l.b16 %v44
  %v173 = vunpack.c.l.b16 %v45
  %v174 = vunpack.c.l.b16 %v46
  %v175 = vunpack.c.l.b16 %v47
  %v176 = vunpack.c.l.b16 %v48
  %v177 = vunpack.c.l.b16 %v49
  %v178 = vunpack.c.l.b16 %v50
  %v179 = vunpack.c.l.b16 %v51
  %v180 = vunpack.c.l.b16 %v52
  %v181 = vunpack.c.l.b16 %v53
  %v182 = vunpack.c.l.b16 %v54
  %v183 = vunpack.c.l.b16 %v55
  %v184 = vunpack.c.l.b16 %v56
  %v185 = vunpack.c.l.b16 %v57
  %v186 = vunpack.c.l.b16 %v58
  %v187 = vpack.c.b16 %v172, %v171
  %v188 = vpack.c.b16 %v174, %v173
  %v189 = vpack.c.b16 %v176, %v175
  %v190 = vpack.c.b16 %v178, %v177
  %v191 = vpack.c.b16 %v180, %v179
  %v192 = vpack.c.b16 %v182, %v181
  %v193 = vpack.c.b16 %v184, %v183
  %v194 = vpack.c.b16 %v186, %v185
  %203 = vmatpush.bf16.msra.mxu0 %v194
  %204 = vmatpush.bf16.msra.mxu0 %v193
  %205 = vmatpush.bf16.msra.mxu0 %v192
  %206 = vmatpush.bf16.msra.mxu0 %v191
  %207 = vmatpush.bf16.msra.mxu0 %v190
  %208 = vmatpush.bf16.msra.mxu0 %v189
  %209 = vmatpush.bf16.msra.mxu0 %v188
  %210 = vmatpush.bf16.msra.mxu0 %v187
  %211 = vmatmul.bf16.gmra.mxu0 %v123
  %v212 = vpop.f32.mrf.mxu0
  %v213 = vadd.f32 0.0, %v212
  %v214 = vpop.f32.mrf.mxu0
  %v215 = vadd.f32 0.0, %v214
  %216 = vmatmul.bf16.gmra.mxu0 %v124
  %v217 = vpop.f32.mrf.mxu0
  %v218 = vadd.f32 0.0, %v217
  %v219 = vpop.f32.mrf.mxu0
  %v220 = vadd.f32 0.0, %v219
  %221 = vmatmul.bf16.gmra.mxu0 %v125
  %v222 = vpop.f32.mrf.mxu0
  %v223 = vadd.f32 0.0, %v222
  %v224 = vpop.f32.mrf.mxu0
  %v225 = vadd.f32 0.0, %v224
  %226 = vmatmul.bf16.gmra.mxu0 %v126
  %v227 = vpop.f32.mrf.mxu0
  %v228 = vadd.f32 0.0, %v227
  %v229 = vpop.f32.mrf.mxu0
  %v230 = vadd.f32 0.0, %v229
  %231 = vmatmul.bf16.gmra.mxu0 %v127
  %v232 = vpop.f32.mrf.mxu0
  %v233 = vadd.f32 0.0, %v232
  %v234 = vpop.f32.mrf.mxu0
  %v235 = vadd.f32 0.0, %v234
  %236 = vmatmul.bf16.gmra.mxu0 %v128
  %v237 = vpop.f32.mrf.mxu0
  %v238 = vadd.f32 0.0, %v237
  %v239 = vpop.f32.mrf.mxu0
  %v240 = vadd.f32 0.0, %v239
  %241 = vmatmul.bf16.gmra.mxu0 %v129
  %v242 = vpop.f32.mrf.mxu0
  %v243 = vadd.f32 0.0, %v242
  %v244 = vpop.f32.mrf.mxu0
  %v245 = vadd.f32 0.0, %v244
  %246 = vmatmul.bf16.gmra.mxu0 %v130
  %v247 = vpop.f32.mrf.mxu0
  %v248 = vadd.f32 0.0, %v247
  %v249 = vpop.f32.mrf.mxu0
  %v250 = vadd.f32 0.0, %v249
  %251 = vmatmul.bf16.gmra.mxu0 %v131
  %v252 = vpop.f32.mrf.mxu0
  %v253 = vadd.f32 0.0, %v252
  %v254 = vpop.f32.mrf.mxu0
  %v255 = vadd.f32 0.0, %v254
  %256 = vmatmul.bf16.gmra.mxu0 %v132
  %v257 = vpop.f32.mrf.mxu0
  %v258 = vadd.f32 0.0, %v257
  %v259 = vpop.f32.mrf.mxu0
  %v260 = vadd.f32 0.0, %v259
  %261 = vmatmul.bf16.gmra.mxu0 %v133
  %v262 = vpop.f32.mrf.mxu0
  %v263 = vadd.f32 0.0, %v262
  %v264 = vpop.f32.mrf.mxu0
  %v265 = vadd.f32 0.0, %v264
  %266 = vmatmul.bf16.gmra.mxu0 %v134
  %v267 = vpop.f32.mrf.mxu0
  %v268 = vadd.f32 0.0, %v267
  %v269 = vpop.f32.mrf.mxu0
  %v270 = vadd.f32 0.0, %v269
  %271 = vmatmul.bf16.gmra.mxu0 %v135
  %v272 = vpop.f32.mrf.mxu0
  %v273 = vadd.f32 0.0, %v272
  %v274 = vpop.f32.mrf.mxu0
  %v275 = vadd.f32 0.0, %v274
  %276 = vmatmul.bf16.gmra.mxu0 %v136
  %v277 = vpop.f32.mrf.mxu0
  %v278 = vadd.f32 0.0, %v277
  %v279 = vpop.f32.mrf.mxu0
  %v280 = vadd.f32 0.0, %v279
  %281 = vmatmul.bf16.gmra.mxu0 %v137
  %v282 = vpop.f32.mrf.mxu0
  %v283 = vadd.f32 0.0, %v282
  %v284 = vpop.f32.mrf.mxu0
  %v285 = vadd.f32 0.0, %v284
  %286 = vmatmul.bf16.gmra.mxu0 %v138
  %v287 = vpop.f32.mrf.mxu0
  %v288 = vadd.f32 0.0, %v287
  %v289 = vpop.f32.mrf.mxu0
  %v290 = vadd.f32 0.0, %v289
  %291 = vdwg.mxu0
  %v292 = vpack.c.bf16 %v213, %v213
  %v293 = vpack.c.bf16 %v215, %v215
  %v294 = vpack.c.bf16 %v218, %v218
  %v295 = vpack.c.bf16 %v220, %v220
  %v296 = vpack.c.bf16 %v223, %v223
  %v297 = vpack.c.bf16 %v225, %v225
  %v298 = vpack.c.bf16 %v228, %v228
  %v299 = vpack.c.bf16 %v230, %v230
  %v300 = vpack.c.bf16 %v233, %v233
  %v301 = vpack.c.bf16 %v235, %v235
  %v302 = vpack.c.bf16 %v238, %v238
  %v303 = vpack.c.bf16 %v240, %v240
  %v304 = vpack.c.bf16 %v243, %v243
  %v305 = vpack.c.bf16 %v245, %v245
  %v306 = vpack.c.bf16 %v248, %v248
  %v307 = vpack.c.bf16 %v250, %v250
  %v308 = vpack.c.bf16 %v253, %v253
  %v309 = vpack.c.bf16 %v255, %v255
  %v310 = vpack.c.bf16 %v258, %v258
  %v311 = vpack.c.bf16 %v260, %v260
  %v312 = vpack.c.bf16 %v263, %v263
  %v313 = vpack.c.bf16 %v265, %v265
  %v314 = vpack.c.bf16 %v268, %v268
  %v315 = vpack.c.bf16 %v270, %v270
  %v316 = vpack.c.bf16 %v273, %v273
  %v317 = vpack.c.bf16 %v275, %v275
  %v318 = vpack.c.bf16 %v278, %v278
  %v319 = vpack.c.bf16 %v280, %v280
  %v320 = vpack.c.bf16 %v283, %v283
  %v321 = vpack.c.bf16 %v285, %v285
  %v322 = vpack.c.bf16 %v288, %v288
  %v323 = vpack.c.bf16 %v290, %v290
  %324 = vst [vmem:[%s2] sm:$0xf] %v292
  %325 = vst [vmem:[%s2 + $0x4] sm:$0xf] %v293
  %326 = vst [vmem:[%s2 + $0x8] sm:$0xf] %v294
  %327 = vst [vmem:[%s2 + $0xc] sm:$0xf] %v295
  %328 = vst [vmem:[%s2 + $0x10] sm:$0xf] %v296
  %329 = vst [vmem:[%s2 + $0x14] sm:$0xf] %v297
  %330 = vst [vmem:[%s2 + $0x18] sm:$0xf] %v298
  %331 = vst [vmem:[%s2 + $0x1c] sm:$0xf] %v299
  %332 = vst [vmem:[%s2 + $0x20] sm:$0xf] %v300
  %333 = vst [vmem:[%s2 + $0x24] sm:$0xf] %v301
  %334 = vst [vmem:[%s2 + $0x28] sm:$0xf] %v302
  %335 = vst [vmem:[%s2 + $0x2c] sm:$0xf] %v303
  %336 = vst [vmem:[%s2 + $0x30] sm:$0xf] %v304
  %337 = vst [vmem:[%s2 + $0x34] sm:$0xf] %v305
  %338 = vst [vmem:[%s2 + $0x38] sm:$0xf] %v306
  %339 = vst [vmem:[%s2 + $0x3c] sm:$0xf] %v307
  %340 = vst [vmem:[%s2 + $0x40] sm:$0xf] %v308
  %341 = vst [vmem:[%s2 + $0x44] sm:$0xf] %v309
  %342 = vst [vmem:[%s2 + $0x48] sm:$0xf] %v310
  %343 = vst [vmem:[%s2 + $0x4c] sm:$0xf] %v311
  %344 = vst [vmem:[%s2 + $0x50] sm:$0xf] %v312
  %345 = vst [vmem:[%s2 + $0x54] sm:$0xf] %v313
  %346 = vst [vmem:[%s2 + $0x58] sm:$0xf] %v314
  %347 = vst [vmem:[%s2 + $0x5c] sm:$0xf] %v315
  %348 = vst [vmem:[%s2 + $0x60] sm:$0xf] %v316
  %349 = vst [vmem:[%s2 + $0x64] sm:$0xf] %v317
  %350 = vst [vmem:[%s2 + $0x68] sm:$0xf] %v318
  %351 = vst [vmem:[%s2 + $0x6c] sm:$0xf] %v319
  %352 = vst [vmem:[%s2 + $0x70] sm:$0xf] %v320
  %353 = vst [vmem:[%s2 + $0x74] sm:$0xf] %v321
  %354 = vst [vmem:[%s2 + $0x78] sm:$0xf] %v322
  %355 = vst [vmem:[%s2 + $0x7c] sm:$0xf] %v323
  // Predicated region
  $region10: #{gcn_forward.6} parent=0 // pred_check
    _
  $region11: #{gcn_forward.6} parent=0 // pred_check_branch
    %357 = sbr.rel (0) target = $region13
  $region12: #{gcn_forward.6} parent=0 // pred_region
    _
  $region13: #{gcn_forward.6} parent=0 // pred_fallthru
    _
  // Predicated region
  $region14: #{gcn_forward.6} parent=0 // pred_check
    _
  $region15: #{gcn_forward.6} parent=0 // pred_check_branch
    %359 = sbr.rel (0) target = $region17
  $region16: #{gcn_forward.6} parent=0 // pred_region
    _
  $region17: #{gcn_forward.6} parent=0 // pred_fallthru
    _

// kernel: gcn_forward.4
$region0: #{gcn_forward.4}
  #allocation0 [shape = 'u32[]', space=smem, size = 0x4, offset = 0x4, fixed_abs, tag = 'smem constant byte address 0x4 - core index']
  #allocation1 [shape = 'u32[72,128]{1,0:T(1,128)}', space=vmem, size = 0x9000, scoped, tag = 'internal scratch']
  %s0 = inlined_call_operand.vmem [shape: bf16[256,16], index: 0, kind: input, shape index: {}]
  %s1 = inlined_call_operand.vmem [shape: bf16[16,128], index: 1, kind: input, shape index: {}]
  %s2 = inlined_call_operand.vmem [shape: bf16[256,128], index: 2, kind: output, shape index: {}]
  %s3 = sld [smem:[#allocation0]]
  $region18: #{gcn_forward.4} parent=0
    _
  %s5 = ssub.s32 1, %s3
  %s6 = scalar_select 0, %s5, %s3
  // Predicated region
  $region2: #{gcn_forward.4} parent=0 // pred_check
    _
  $region3: #{gcn_forward.4} parent=0 // pred_check_branch
    %8 = sbr.rel (0) target = $region5
  $region4: #{gcn_forward.4} parent=0 // pred_region
    _
  $region5: #{gcn_forward.4} parent=0 // pred_fallthru
    _
  // Predicated region
  $region6: #{gcn_forward.4} parent=0 // pred_check
    _
  $region7: #{gcn_forward.4} parent=0 // pred_check_branch
    %10 = sbr.rel (0) target = $region9
  $region8: #{gcn_forward.4} parent=0 // pred_region
    _
  $region9: #{gcn_forward.4} parent=0 // pred_fallthru
    _
  %v12 = vld [vmem:[%s0] sm:$0xf]
  %v13 = vld [vmem:[%s0 + $0x4] sm:$0xf]
  %v14 = vld [vmem:[%s0 + $0x8] sm:$0xf]
  %v15 = vld [vmem:[%s0 + $0xc] sm:$0xf]
  %v16 = vld [vmem:[%s0 + $0x10] sm:$0xf]
  %v17 = vld [vmem:[%s0 + $0x14] sm:$0xf]
  %v18 = vld [vmem:[%s0 + $0x18] sm:$0xf]
  %v19 = vld [vmem:[%s0 + $0x1c] sm:$0xf]
  %v20 = vld [vmem:[%s0 + $0x20] sm:$0xf]
  %v21 = vld [vmem:[%s0 + $0x24] sm:$0xf]
  %v22 = vld [vmem:[%s0 + $0x28] sm:$0xf]
  %v23 = vld [vmem:[%s0 + $0x2c] sm:$0xf]
  %v24 = vld [vmem:[%s0 + $0x30] sm:$0xf]
  %v25 = vld [vmem:[%s0 + $0x34] sm:$0xf]
  %v26 = vld [vmem:[%s0 + $0x38] sm:$0xf]
  %v27 = vld [vmem:[%s0 + $0x3c] sm:$0xf]
  %v28 = vld [vmem:[%s0 + $0x40] sm:$0xf]
  %v29 = vld [vmem:[%s0 + $0x44] sm:$0xf]
  %v30 = vld [vmem:[%s0 + $0x48] sm:$0xf]
  %v31 = vld [vmem:[%s0 + $0x4c] sm:$0xf]
  %v32 = vld [vmem:[%s0 + $0x50] sm:$0xf]
  %v33 = vld [vmem:[%s0 + $0x54] sm:$0xf]
  %v34 = vld [vmem:[%s0 + $0x58] sm:$0xf]
  %v35 = vld [vmem:[%s0 + $0x5c] sm:$0xf]
  %v36 = vld [vmem:[%s0 + $0x60] sm:$0xf]
  %v37 = vld [vmem:[%s0 + $0x64] sm:$0xf]
  %v38 = vld [vmem:[%s0 + $0x68] sm:$0xf]
  %v39 = vld [vmem:[%s0 + $0x6c] sm:$0xf]
  %v40 = vld [vmem:[%s0 + $0x70] sm:$0xf]
  %v41 = vld [vmem:[%s0 + $0x74] sm:$0xf]
  %v42 = vld [vmem:[%s0 + $0x78] sm:$0xf]
  %v43 = vld [vmem:[%s0 + $0x7c] sm:$0xf]
  %v44 = vld [vmem:[%s1] sm:$0xf]
  %v45 = vld [vmem:[%s1 + $0x4] sm:$0xf]
  %v78 = vunpack.c.l.b16 %v12
  %v79 = vunpack.c.l.b16 %v13
  %v80 = vunpack.c.l.b16 %v14
  %v81 = vunpack.c.l.b16 %v15
  %v82 = vunpack.c.l.b16 %v16
  %v83 = vunpack.c.l.b16 %v17
  %v84 = vunpack.c.l.b16 %v18
  %v85 = vunpack.c.l.b16 %v19
  %v86 = vunpack.c.l.b16 %v20
  %v87 = vunpack.c.l.b16 %v21
  %v88 = vunpack.c.l.b16 %v22
  %v89 = vunpack.c.l.b16 %v23
  %v90 = vunpack.c.l.b16 %v24
  %v91 = vunpack.c.l.b16 %v25
  %v92 = vunpack.c.l.b16 %v26
  %v93 = vunpack.c.l.b16 %v27
  %v94 = vunpack.c.l.b16 %v28
  %v95 = vunpack.c.l.b16 %v29
  %v96 = vunpack.c.l.b16 %v30
  %v97 = vunpack.c.l.b16 %v31
  %v98 = vunpack.c.l.b16 %v32
  %v99 = vunpack.c.l.b16 %v33
  %v100 = vunpack.c.l.b16 %v34
  %v101 = vunpack.c.l.b16 %v35
  %v102 = vunpack.c.l.b16 %v36
  %v103 = vunpack.c.l.b16 %v37
  %v104 = vunpack.c.l.b16 %v38
  %v105 = vunpack.c.l.b16 %v39
  %v106 = vunpack.c.l.b16 %v40
  %v107 = vunpack.c.l.b16 %v41
  %v108 = vunpack.c.l.b16 %v42
  %v109 = vunpack.c.l.b16 %v43
  %v110 = vpack.c.b16 %v79, %v78
  %v111 = vpack.c.b16 %v81, %v80
  %v112 = vpack.c.b16 %v83, %v82
  %v113 = vpack.c.b16 %v85, %v84
  %v114 = vpack.c.b16 %v87, %v86
  %v115 = vpack.c.b16 %v89, %v88
  %v116 = vpack.c.b16 %v91, %v90
  %v117 = vpack.c.b16 %v93, %v92
  %v118 = vpack.c.b16 %v95, %v94
  %v119 = vpack.c.b16 %v97, %v96
  %v120 = vpack.c.b16 %v99, %v98
  %v121 = vpack.c.b16 %v101, %v100
  %v122 = vpack.c.b16 %v103, %v102
  %v123 = vpack.c.b16 %v105, %v104
  %v124 = vpack.c.b16 %v107, %v106
  %v125 = vpack.c.b16 %v109, %v108
  %v128 = vunpack.c.l.b16 %v44
  %v129 = vunpack.c.l.b16 %v45
  %v130 = vpack.c.b16 %v129, %v128
  %vm132 = vcmask 130048
  %v134 = vsel %vm132, %v110, 0
  %v137 = vsel %vm132, %v111, 0
  %v140 = vsel %vm132, %v112, 0
  %v143 = vsel %vm132, %v113, 0
  %v146 = vsel %vm132, %v114, 0
  %v149 = vsel %vm132, %v115, 0
  %v152 = vsel %vm132, %v116, 0
  %v155 = vsel %vm132, %v117, 0
  %v158 = vsel %vm132, %v118, 0
  %v161 = vsel %vm132, %v119, 0
  %v164 = vsel %vm132, %v120, 0
  %v167 = vsel %vm132, %v121, 0
  %v170 = vsel %vm132, %v122, 0
  %v173 = vsel %vm132, %v123, 0
  %v176 = vsel %vm132, %v124, 0
  %v179 = vsel %vm132, %v125, 0
  %181 = vmatpush.bf16.msra.mxu0 0
  %182 = vmatpush.bf16.msra.mxu0 0
  %183 = vmatpush.bf16.msra.mxu0 0
  %184 = vmatpush.bf16.msra.mxu0 0
  %185 = vmatpush.bf16.msra.mxu0 0
  %186 = vmatpush.bf16.msra.mxu0 0
  %187 = vmatpush.bf16.msra.mxu0 0
  %188 = vmatpush.bf16.msra.mxu0 %v130
  %189 = vmatmul.bf16.gmra.mxu0 %v134
  %v190 = vpop.f32.mrf.mxu0
  %v191 = vadd.f32 0.0, %v190
  %v192 = vpop.f32.mrf.mxu0
  %v193 = vadd.f32 0.0, %v192
  %194 = vmatmul.bf16.gmra.mxu0 %v137
  %v195 = vpop.f32.mrf.mxu0
  %v196 = vadd.f32 0.0, %v195
  %v197 = vpop.f32.mrf.mxu0
  %v198 = vadd.f32 0.0, %v197
  %199 = vmatmul.bf16.gmra.mxu0 %v140
  %v200 = vpop.f32.mrf.mxu0
  %v201 = vadd.f32 0.0, %v200
  %v202 = vpop.f32.mrf.mxu0
  %v203 = vadd.f32 0.0, %v202
  %204 = vmatmul.bf16.gmra.mxu0 %v143
  %v205 = vpop.f32.mrf.mxu0
  %v206 = vadd.f32 0.0, %v205
  %v207 = vpop.f32.mrf.mxu0
  %v208 = vadd.f32 0.0, %v207
  %209 = vmatmul.bf16.gmra.mxu0 %v146
  %v210 = vpop.f32.mrf.mxu0
  %v211 = vadd.f32 0.0, %v210
  %v212 = vpop.f32.mrf.mxu0
  %v213 = vadd.f32 0.0, %v212
  %214 = vmatmul.bf16.gmra.mxu0 %v149
  %v215 = vpop.f32.mrf.mxu0
  %v216 = vadd.f32 0.0, %v215
  %v217 = vpop.f32.mrf.mxu0
  %v218 = vadd.f32 0.0, %v217
  %219 = vmatmul.bf16.gmra.mxu0 %v152
  %v220 = vpop.f32.mrf.mxu0
  %v221 = vadd.f32 0.0, %v220
  %v222 = vpop.f32.mrf.mxu0
  %v223 = vadd.f32 0.0, %v222
  %224 = vmatmul.bf16.gmra.mxu0 %v155
  %v225 = vpop.f32.mrf.mxu0
  %v226 = vadd.f32 0.0, %v225
  %v227 = vpop.f32.mrf.mxu0
  %v228 = vadd.f32 0.0, %v227
  %229 = vmatmul.bf16.gmra.mxu0 %v158
  %v230 = vpop.f32.mrf.mxu0
  %v231 = vadd.f32 0.0, %v230
  %v232 = vpop.f32.mrf.mxu0
  %v233 = vadd.f32 0.0, %v232
  %234 = vmatmul.bf16.gmra.mxu0 %v161
  %v235 = vpop.f32.mrf.mxu0
  %v236 = vadd.f32 0.0, %v235
  %v237 = vpop.f32.mrf.mxu0
  %v238 = vadd.f32 0.0, %v237
  %239 = vmatmul.bf16.gmra.mxu0 %v164
  %v240 = vpop.f32.mrf.mxu0
  %v241 = vadd.f32 0.0, %v240
  %v242 = vpop.f32.mrf.mxu0
  %v243 = vadd.f32 0.0, %v242
  %244 = vmatmul.bf16.gmra.mxu0 %v167
  %v245 = vpop.f32.mrf.mxu0
  %v246 = vadd.f32 0.0, %v245
  %v247 = vpop.f32.mrf.mxu0
  %v248 = vadd.f32 0.0, %v247
  %249 = vmatmul.bf16.gmra.mxu0 %v170
  %v250 = vpop.f32.mrf.mxu0
  %v251 = vadd.f32 0.0, %v250
  %v252 = vpop.f32.mrf.mxu0
  %v253 = vadd.f32 0.0, %v252
  %254 = vmatmul.bf16.gmra.mxu0 %v173
  %v255 = vpop.f32.mrf.mxu0
  %v256 = vadd.f32 0.0, %v255
  %v257 = vpop.f32.mrf.mxu0
  %v258 = vadd.f32 0.0, %v257
  %259 = vmatmul.bf16.gmra.mxu0 %v176
  %v260 = vpop.f32.mrf.mxu0
  %v261 = vadd.f32 0.0, %v260
  %v262 = vpop.f32.mrf.mxu0
  %v263 = vadd.f32 0.0, %v262
  %264 = vmatmul.bf16.gmra.mxu0 %v179
  %v265 = vpop.f32.mrf.mxu0
  %v266 = vadd.f32 0.0, %v265
  %v267 = vpop.f32.mrf.mxu0
  %v268 = vadd.f32 0.0, %v267
  %269 = vdwg.mxu0
  %v270 = vpack.c.bf16 %v191, %v191
  %v271 = vpack.c.bf16 %v193, %v193
  %v272 = vpack.c.bf16 %v196, %v196
  %v273 = vpack.c.bf16 %v198, %v198
  %v274 = vpack.c.bf16 %v201, %v201
  %v275 = vpack.c.bf16 %v203, %v203
  %v276 = vpack.c.bf16 %v206, %v206
  %v277 = vpack.c.bf16 %v208, %v208
  %v278 = vpack.c.bf16 %v211, %v211
  %v279 = vpack.c.bf16 %v213, %v213
  %v280 = vpack.c.bf16 %v216, %v216
  %v281 = vpack.c.bf16 %v218, %v218
  %v282 = vpack.c.bf16 %v221, %v221
  %v283 = vpack.c.bf16 %v223, %v223
  %v284 = vpack.c.bf16 %v226, %v226
  %v285 = vpack.c.bf16 %v228, %v228
  %v286 = vpack.c.bf16 %v231, %v231
  %v287 = vpack.c.bf16 %v233, %v233
  %v288 = vpack.c.bf16 %v236, %v236
  %v289 = vpack.c.bf16 %v238, %v238
  %v290 = vpack.c.bf16 %v241, %v241
  %v291 = vpack.c.bf16 %v243, %v243
  %v292 = vpack.c.bf16 %v246, %v246
  %v293 = vpack.c.bf16 %v248, %v248
  %v294 = vpack.c.bf16 %v251, %v251
  %v295 = vpack.c.bf16 %v253, %v253
  %v296 = vpack.c.bf16 %v256, %v256
  %v297 = vpack.c.bf16 %v258, %v258
  %v298 = vpack.c.bf16 %v261, %v261
  %v299 = vpack.c.bf16 %v263, %v263
  %v300 = vpack.c.bf16 %v266, %v266
  %v301 = vpack.c.bf16 %v268, %v268
  %302 = vst [vmem:[%s2] sm:$0xf] %v270
  %303 = vst [vmem:[%s2 + $0x4] sm:$0xf] %v271
  %304 = vst [vmem:[%s2 + $0x8] sm:$0xf] %v272
  %305 = vst [vmem:[%s2 + $0xc] sm:$0xf] %v273
  %306 = vst [vmem:[%s2 + $0x10] sm:$0xf] %v274
  %307 = vst [vmem:[%s2 + $0x14] sm:$0xf] %v275
  %308 = vst [vmem:[%s2 + $0x18] sm:$0xf] %v276
  %309 = vst [vmem:[%s2 + $0x1c] sm:$0xf] %v277
  %310 = vst [vmem:[%s2 + $0x20] sm:$0xf] %v278
  %311 = vst [vmem:[%s2 + $0x24] sm:$0xf] %v279
  %312 = vst [vmem:[%s2 + $0x28] sm:$0xf] %v280
  %313 = vst [vmem:[%s2 + $0x2c] sm:$0xf] %v281
  %314 = vst [vmem:[%s2 + $0x30] sm:$0xf] %v282
  %315 = vst [vmem:[%s2 + $0x34] sm:$0xf] %v283
  %316 = vst [vmem:[%s2 + $0x38] sm:$0xf] %v284
  %317 = vst [vmem:[%s2 + $0x3c] sm:$0xf] %v285
  %318 = vst [vmem:[%s2 + $0x40] sm:$0xf] %v286
  %319 = vst [vmem:[%s2 + $0x44] sm:$0xf] %v287
  %320 = vst [vmem:[%s2 + $0x48] sm:$0xf] %v288
  %321 = vst [vmem:[%s2 + $0x4c] sm:$0xf] %v289
  %322 = vst [vmem:[%s2 + $0x50] sm:$0xf] %v290
  %323 = vst [vmem:[%s2 + $0x54] sm:$0xf] %v291
  %324 = vst [vmem:[%s2 + $0x58] sm:$0xf] %v292
  %325 = vst [vmem:[%s2 + $0x5c] sm:$0xf] %v293
  %326 = vst [vmem:[%s2 + $0x60] sm:$0xf] %v294
  %327 = vst [vmem:[%s2 + $0x64] sm:$0xf] %v295
  %328 = vst [vmem:[%s2 + $0x68] sm:$0xf] %v296
  %329 = vst [vmem:[%s2 + $0x6c] sm:$0xf] %v297
  %330 = vst [vmem:[%s2 + $0x70] sm:$0xf] %v298
  %331 = vst [vmem:[%s2 + $0x74] sm:$0xf] %v299
  %332 = vst [vmem:[%s2 + $0x78] sm:$0xf] %v300
  %333 = vst [vmem:[%s2 + $0x7c] sm:$0xf] %v301
  // Predicated region
  $region10: #{gcn_forward.4} parent=0 // pred_check
    _
  $region11: #{gcn_forward.4} parent=0 // pred_check_branch
    %335 = sbr.rel (0) target = $region13
  $region12: #{gcn_forward.4} parent=0 // pred_region
    _
  $region13: #{gcn_forward.4} parent=0 // pred_fallthru
    _
  // Predicated region
  $region14: #{gcn_forward.4} parent=0 // pred_check
    _
  $region15: #{gcn_forward.4} parent=0 // pred_check_branch
    %337 = sbr.rel (0) target = $region17
  $region16: #{gcn_forward.4} parent=0 // pred_region
    _
  $region17: #{gcn_forward.4} parent=0 // pred_fallthru
    _

// kernel: gcn_forward.5
$region0: #{gcn_forward.5}
  #allocation0 [shape = 'u32[]', space=smem, size = 0x4, offset = 0x4, fixed_abs, tag = 'smem constant byte address 0x4 - core index']
  #allocation1 [shape = 'u32[72,128]{1,0:T(1,128)}', space=vmem, size = 0x9000, scoped, tag = 'internal scratch']
  #allocation2 [shape = 'f32[256,128]{1,0:T(8,128)}', space=vmem, size = 0x20000, scoped, tag = 'scratch operand']
  %s0 = inlined_call_operand.vmem [shape: bf16[256,256], index: 0, kind: input, shape index: {}]
  %s1 = inlined_call_operand.vmem [shape: bf16[256,128], index: 1, kind: input, shape index: {}]
  %s2 = inlined_call_operand.vmem [shape: f32[1,128], index: 2, kind: input, shape index: {}]
  %s3 = inlined_call_operand.vmem [shape: bf16[256,128], index: 3, kind: output, shape index: {}]
  %s4 = sld [smem:[#allocation0]]
  $region30: #{gcn_forward.5} parent=0
    _
  %s6 = ssub.s32 1, %s4
  %s7 = scalar_select 0, %s6, %s4
  // Predicated region
  $region2: #{gcn_forward.5} parent=0 // pred_check
    _
  $region3: #{gcn_forward.5} parent=0 // pred_check_branch
    %9 = sbr.rel (0) target = $region5
  $region4: #{gcn_forward.5} parent=0 // pred_region
    _
  $region5: #{gcn_forward.5} parent=0 // pred_fallthru
    _
  // Predicated region
  $region6: #{gcn_forward.5} parent=0 // pred_check
    _
  $region7: #{gcn_forward.5} parent=0 // pred_check_branch
    %11 = sbr.rel (0) target = $region9
  $region8: #{gcn_forward.5} parent=0 // pred_region
    _
  $region9: #{gcn_forward.5} parent=0 // pred_fallthru
    _
  // Predicated region
  $region10: #{gcn_forward.5} parent=0 // pred_check
    _
  $region11: #{gcn_forward.5} parent=0 // pred_check_branch
    %13 = sbr.rel (0) target = $region13
  $region12: #{gcn_forward.5} parent=0 // pred_region
    _
  $region13: #{gcn_forward.5} parent=0 // pred_fallthru
    _
  %p14 = scmp.eq.s32.totalorder 0, 0
  // Predicated region
  $region14: #{gcn_forward.5} parent=0 // pred_check
    %p15 = pneg %p14
  $region15: #{gcn_forward.5} parent=0 // pred_check_branch
    %17 = sbr.rel (%p15) target = $region17
  $region16: #{gcn_forward.5} parent=0 // pred_region
    %18 = vst [vmem:[#allocation2] sm:$0xff] 0.0
    %19 = vst [vmem:[#allocation2 + $0x8] sm:$0xff] 0.0
    %20 = vst [vmem:[#allocation2 + $0x10] sm:$0xff] 0.0
    %21 = vst [vmem:[#allocation2 + $0x18] sm:$0xff] 0.0
    %22 = vst [vmem:[#allocation2 + $0x20] sm:$0xff] 0.0
    %23 = vst [vmem:[#allocation2 + $0x28] sm:$0xff] 0.0
    %24 = vst [vmem:[#allocation2 + $0x30] sm:$0xff] 0.0
    %25 = vst [vmem:[#allocation2 + $0x38] sm:$0xff] 0.0
    %26 = vst [vmem:[#allocation2 + $0x40] sm:$0xff] 0.0
    %27 = vst [vmem:[#allocation2 + $0x48] sm:$0xff] 0.0
    %28 = vst [vmem:[#allocation2 + $0x50] sm:$0xff] 0.0
    %29 = vst [vmem:[#allocation2 + $0x58] sm:$0xff] 0.0
    %30 = vst [vmem:[#allocation2 + $0x60] sm:$0xff] 0.0
    %31 = vst [vmem:[#allocation2 + $0x68] sm:$0xff] 0.0
    %32 = vst [vmem:[#allocation2 + $0x70] sm:$0xff] 0.0
    %33 = vst [vmem:[#allocation2 + $0x78] sm:$0xff] 0.0
    %34 = vst [vmem:[#allocation2 + $0x80] sm:$0xff] 0.0
    %35 = vst [vmem:[#allocation2 + $0x88] sm:$0xff] 0.0
    %36 = vst [vmem:[#allocation2 + $0x90] sm:$0xff] 0.0
    %37 = vst [vmem:[#allocation2 + $0x98] sm:$0xff] 0.0
    %38 = vst [vmem:[#allocation2 + $0xa0] sm:$0xff] 0.0
    %39 = vst [vmem:[#allocation2 + $0xa8] sm:$0xff] 0.0
    %40 = vst [vmem:[#allocation2 + $0xb0] sm:$0xff] 0.0
    %41 = vst [vmem:[#allocation2 + $0xb8] sm:$0xff] 0.0
    %42 = vst [vmem:[#allocation2 + $0xc0] sm:$0xff] 0.0
    %43 = vst [vmem:[#allocation2 + $0xc8] sm:$0xff] 0.0
    %44 = vst [vmem:[#allocation2 + $0xd0] sm:$0xff] 0.0
    %45 = vst [vmem:[#allocation2 + $0xd8] sm:$0xff] 0.0
    %46 = vst [vmem:[#allocation2 + $0xe0] sm:$0xff] 0.0
    %47 = vst [vmem:[#allocation2 + $0xe8] sm:$0xff] 0.0
    %48 = vst [vmem:[#allocation2 + $0xf0] sm:$0xff] 0.0
    %49 = vst [vmem:[#allocation2 + $0xf8] sm:$0xff] 0.0
  $region17: #{gcn_forward.5} parent=0 // pred_fallthru
    _
  %s50 = smul.u32 0, 256
  %s51 = sshra.s32 %s50, 3
  %s52 = sand.u32 %s50, 7
  %s53 = smul.addr %s51, 4
  %s54 = scalar_lea.vmem %s1, %s53
  %v55 = vld [vmem:[%s54] sm:$0xf]
  %v56 = vld [vmem:[%s54 + $0x4] sm:$0xf]
  %v57 = vld [vmem:[%s54 + $0x8] sm:$0xf]
  %v58 = vld [vmem:[%s54 + $0xc] sm:$0xf]
  %v59 = vld [vmem:[%s54 + $0x10] sm:$0xf]
  %v60 = vld [vmem:[%s54 + $0x14] sm:$0xf]
  %v61 = vld [vmem:[%s54 + $0x18] sm:$0xf]
  %v62 = vld [vmem:[%s54 + $0x1c] sm:$0xf]
  %v63 = vld [vmem:[%s54 + $0x20] sm:$0xf]
  %v64 = vld [vmem:[%s54 + $0x24] sm:$0xf]
  %v65 = vld [vmem:[%s54 + $0x28] sm:$0xf]
  %v66 = vld [vmem:[%s54 + $0x2c] sm:$0xf]
  %v67 = vld [vmem:[%s54 + $0x30] sm:$0xf]
  %v68 = vld [vmem:[%s54 + $0x34] sm:$0xf]
  %v69 = vld [vmem:[%s54 + $0x38] sm:$0xf]
  %v70 = vld [vmem:[%s54 + $0x3c] sm:$0xf]
  %v71 = vld [vmem:[%s54 + $0x40] sm:$0xf]
  %v72 = vld [vmem:[%s54 + $0x44] sm:$0xf]
  %v73 = vld [vmem:[%s54 + $0x48] sm:$0xf]
  %v74 = vld [vmem:[%s54 + $0x4c] sm:$0xf]
  %v75 = vld [vmem:[%s54 + $0x50] sm:$0xf]
  %v76 = vld [vmem:[%s54 + $0x54] sm:$0xf]
  %v77 = vld [vmem:[%s54 + $0x58] sm:$0xf]
  %v78 = vld [vmem:[%s54 + $0x5c] sm:$0xf]
  %v79 = vld [vmem:[%s54 + $0x60] sm:$0xf]
  %v80 = vld [vmem:[%s54 + $0x64] sm:$0xf]
  %v81 = vld [vmem:[%s54 + $0x68] sm:$0xf]
  %v82 = vld [vmem:[%s54 + $0x6c] sm:$0xf]
  %v83 = vld [vmem:[%s54 + $0x70] sm:$0xf]
  %v84 = vld [vmem:[%s54 + $0x74] sm:$0xf]
  %v85 = vld [vmem:[%s54 + $0x78] sm:$0xf]
  %v86 = vld [vmem:[%s54 + $0x7c] sm:$0xf]
  %v87 = vld [vmem:[#allocation2] sm:$0xff]
  %v88 = vld [vmem:[#allocation2 + $0x8] sm:$0xff]
  %v89 = vld [vmem:[#allocation2 + $0x10] sm:$0xff]
  %v90 = vld [vmem:[#allocation2 + $0x18] sm:$0xff]
  %v91 = vld [vmem:[#allocation2 + $0x20] sm:$0xff]
  %v92 = vld [vmem:[#allocation2 + $0x28] sm:$0xff]
  %v93 = vld [vmem:[#allocation2 + $0x30] sm:$0xff]
  %v94 = vld [vmem:[#allocation2 + $0x38] sm:$0xff]
  %v95 = vld [vmem:[#allocation2 + $0x40] sm:$0xff]
  %v96 = vld [vmem:[#allocation2 + $0x48] sm:$0xff]
  %v97 = vld [vmem:[#allocation2 + $0x50] sm:$0xff]
  %v98 = vld [vmem:[#allocation2 + $0x58] sm:$0xff]
  %v99 = vld [vmem:[#allocation2 + $0x60] sm:$0xff]
  %v100 = vld [vmem:[#allocation2 + $0x68] sm:$0xff]
  %v101 = vld [vmem:[#allocation2 + $0x70] sm:$0xff]
  %v102 = vld [vmem:[#allocation2 + $0x78] sm:$0xff]
  %v103 = vld [vmem:[#allocation2 + $0x80] sm:$0xff]
  %v104 = vld [vmem:[#allocation2 + $0x88] sm:$0xff]
  %v105 = vld [vmem:[#allocation2 + $0x90] sm:$0xff]
  %v106 = vld [vmem:[#allocation2 + $0x98] sm:$0xff]
  %v107 = vld [vmem:[#allocation2 + $0xa0] sm:$0xff]
  %v108 = vld [vmem:[#allocation2 + $0xa8] sm:$0xff]
  %v109 = vld [vmem:[#allocation2 + $0xb0] sm:$0xff]
  %v110 = vld [vmem:[#allocation2 + $0xb8] sm:$0xff]
  %v111 = vld [vmem:[#allocation2 + $0xc0] sm:$0xff]
  %v112 = vld [vmem:[#allocation2 + $0xc8] sm:$0xff]
  %v113 = vld [vmem:[#allocation2 + $0xd0] sm:$0xff]
  %v114 = vld [vmem:[#allocation2 + $0xd8] sm:$0xff]
  %v115 = vld [vmem:[#allocation2 + $0xe0] sm:$0xff]
  %v116 = vld [vmem:[#allocation2 + $0xe8] sm:$0xff]
  %v117 = vld [vmem:[#allocation2 + $0xf0] sm:$0xff]
  %v118 = vld [vmem:[#allocation2 + $0xf8] sm:$0xff]
  %v119 = vld [vmem:[%s0] sm:$0xff]
  %v120 = vld [vmem:[%s0 + $0x8] sm:$0xff]
  %v121 = vld [vmem:[%s0 + $0x10] sm:$0xff]
  %v122 = vld [vmem:[%s0 + $0x18] sm:$0xff]
  %v123 = vld [vmem:[%s0 + $0x20] sm:$0xff]
  %v124 = vld [vmem:[%s0 + $0x28] sm:$0xff]
  %v125 = vld [vmem:[%s0 + $0x30] sm:$0xff]
  %v126 = vld [vmem:[%s0 + $0x38] sm:$0xff]
  %v127 = vld [vmem:[%s0 + $0x40] sm:$0xff]
  %v128 = vld [vmem:[%s0 + $0x48] sm:$0xff]
  %v129 = vld [vmem:[%s0 + $0x50] sm:$0xff]
  %v130 = vld [vmem:[%s0 + $0x58] sm:$0xff]
  %v131 = vld [vmem:[%s0 + $0x60] sm:$0xff]
  %v132 = vld [vmem:[%s0 + $0x68] sm:$0xff]
  %v133 = vld [vmem:[%s0 + $0x70] sm:$0xff]
  %v134 = vld [vmem:[%s0 + $0x78] sm:$0xff]
  %v135 = vld [vmem:[%s0 + $0x80] sm:$0xff]
  %v136 = vld [vmem:[%s0 + $0x88] sm:$0xff]
  %v137 = vld [vmem:[%s0 + $0x90] sm:$0xff]
  %v138 = vld [vmem:[%s0 + $0x98] sm:$0xff]
  %v139 = vld [vmem:[%s0 + $0xa0] sm:$0xff]
  %v140 = vld [vmem:[%s0 + $0xa8] sm:$0xff]
  %v141 = vld [vmem:[%s0 + $0xb0] sm:$0xff]
  %v142 = vld [vmem:[%s0 + $0xb8] sm:$0xff]
  %v143 = vld [vmem:[%s0 + $0xc0] sm:$0xff]
  %v144 = vld [vmem:[%s0 + $0xc8] sm:$0xff]
  %v145 = vld [vmem:[%s0 + $0xd0] sm:$0xff]
  %v146 = vld [vmem:[%s0 + $0xd8] sm:$0xff]
  %v147 = vld [vmem:[%s0 + $0xe0] sm:$0xff]
  %v148 = vld [vmem:[%s0 + $0xe8] sm:$0xff]
  %v149 = vld [vmem:[%s0 + $0xf0] sm:$0xff]
  %v150 = vld [vmem:[%s0 + $0xf8] sm:$0xff]
  %v183 = vunpack.c.l.b16 %v119
  %v184 = vunpack.c.h.b16 %v119
  %v185 = vunpack.c.l.b16 %v120
  %v186 = vunpack.c.h.b16 %v120
  %v187 = vunpack.c.l.b16 %v121
  %v188 = vunpack.c.h.b16 %v121
  %v189 = vunpack.c.l.b16 %v122
  %v190 = vunpack.c.h.b16 %v122
  %v191 = vunpack.c.l.b16 %v123
  %v192 = vunpack.c.h.b16 %v123
  %v193 = vunpack.c.l.b16 %v124
  %v194 = vunpack.c.h.b16 %v124
  %v195 = vunpack.c.l.b16 %v125
  %v196 = vunpack.c.h.b16 %v125
  %v197 = vunpack.c.l.b16 %v126
  %v198 = vunpack.c.h.b16 %v126
  %v199 = vunpack.c.l.b16 %v127
  %v200 = vunpack.c.h.b16 %v127
  %v201 = vunpack.c.l.b16 %v128
  %v202 = vunpack.c.h.b16 %v128
  %v203 = vunpack.c.l.b16 %v129
  %v204 = vunpack.c.h.b16 %v129
  %v205 = vunpack.c.l.b16 %v130
  %v206 = vunpack.c.h.b16 %v130
  %v207 = vunpack.c.l.b16 %v131
  %v208 = vunpack.c.h.b16 %v131
  %v209 = vunpack.c.l.b16 %v132
  %v210 = vunpack.c.h.b16 %v132
  %v211 = vunpack.c.l.b16 %v133
  %v212 = vunpack.c.h.b16 %v133
  %v213 = vunpack.c.l.b16 %v134
  %v214 = vunpack.c.h.b16 %v134
  %v215 = vunpack.c.l.b16 %v135
  %v216 = vunpack.c.h.b16 %v135
  %v217 = vunpack.c.l.b16 %v136
  %v218 = vunpack.c.h.b16 %v136
  %v219 = vunpack.c.l.b16 %v137
  %v220 = vunpack.c.h.b16 %v137
  %v221 = vunpack.c.l.b16 %v138
  %v222 = vunpack.c.h.b16 %v138
  %v223 = vunpack.c.l.b16 %v139
  %v224 = vunpack.c.h.b16 %v139
  %v225 = vunpack.c.l.b16 %v140
  %v226 = vunpack.c.h.b16 %v140
  %v227 = vunpack.c.l.b16 %v141
  %v228 = vunpack.c.h.b16 %v141
  %v229 = vunpack.c.l.b16 %v142
  %v230 = vunpack.c.h.b16 %v142
  %v231 = vunpack.c.l.b16 %v143
  %v232 = vunpack.c.h.b16 %v143
  %v233 = vunpack.c.l.b16 %v144
  %v234 = vunpack.c.h.b16 %v144
  %v235 = vunpack.c.l.b16 %v145
  %v236 = vunpack.c.h.b16 %v145
  %v237 = vunpack.c.l.b16 %v146
  %v238 = vunpack.c.h.b16 %v146
  %v239 = vunpack.c.l.b16 %v147
  %v240 = vunpack.c.h.b16 %v147
  %v241 = vunpack.c.l.b16 %v148
  %v242 = vunpack.c.h.b16 %v148
  %v243 = vunpack.c.l.b16 %v149
  %v244 = vunpack.c.h.b16 %v149
  %v245 = vunpack.c.l.b16 %v150
  %v246 = vunpack.c.h.b16 %v150
  %v247 = vpack.c.b16 %v185, %v183
  %v248 = vpack.c.b16 %v186, %v184
  %v249 = vpack.c.b16 %v189, %v187
  %v250 = vpack.c.b16 %v190, %v188
  %v251 = vpack.c.b16 %v193, %v191
  %v252 = vpack.c.b16 %v194, %v192
  %v253 = vpack.c.b16 %v197, %v195
  %v254 = vpack.c.b16 %v198, %v196
  %v255 = vpack.c.b16 %v201, %v199
  %v256 = vpack.c.b16 %v202, %v200
  %v257 = vpack.c.b16 %v205, %v203
  %v258 = vpack.c.b16 %v206, %v204
  %v259 = vpack.c.b16 %v209, %v207
  %v260 = vpack.c.b16 %v210, %v208
  %v261 = vpack.c.b16 %v213, %v211
  %v262 = vpack.c.b16 %v214, %v212
  %v263 = vpack.c.b16 %v217, %v215
  %v264 = vpack.c.b16 %v218, %v216
  %v265 = vpack.c.b16 %v221, %v219
  %v266 = vpack.c.b16 %v222, %v220
  %v267 = vpack.c.b16 %v225, %v223
  %v268 = vpack.c.b16 %v226, %v224
  %v269 = vpack.c.b16 %v229, %v227
  %v270 = vpack.c.b16 %v230, %v228
  %v271 = vpack.c.b16 %v233, %v231
  %v272 = vpack.c.b16 %v234, %v232
  %v273 = vpack.c.b16 %v237, %v235
  %v274 = vpack.c.b16 %v238, %v236
  %v275 = vpack.c.b16 %v241, %v239
  %v276 = vpack.c.b16 %v242, %v240
  %v277 = vpack.c.b16 %v245, %v243
  %v278 = vpack.c.b16 %v246, %v244
  %v343 = vunpack.c.l.b16 %v55
  %v344 = vunpack.c.l.b16 %v56
  %v345 = vunpack.c.l.b16 %v57
  %v346 = vunpack.c.l.b16 %v58
  %v347 = vunpack.c.l.b16 %v59
  %v348 = vunpack.c.l.b16 %v60
  %v349 = vunpack.c.l.b16 %v61
  %v350 = vunpack.c.l.b16 %v62
  %v351 = vunpack.c.l.b16 %v63
  %v352 = vunpack.c.l.b16 %v64
  %v353 = vunpack.c.l.b16 %v65
  %v354 = vunpack.c.l.b16 %v66
  %v355 = vunpack.c.l.b16 %v67
  %v356 = vunpack.c.l.b16 %v68
  %v357 = vunpack.c.l.b16 %v69
  %v358 = vunpack.c.l.b16 %v70
  %v359 = vunpack.c.l.b16 %v71
  %v360 = vunpack.c.l.b16 %v72
  %v361 = vunpack.c.l.b16 %v73
  %v362 = vunpack.c.l.b16 %v74
  %v363 = vunpack.c.l.b16 %v75
  %v364 = vunpack.c.l.b16 %v76
  %v365 = vunpack.c.l.b16 %v77
  %v366 = vunpack.c.l.b16 %v78
  %v367 = vunpack.c.l.b16 %v79
  %v368 = vunpack.c.l.b16 %v80
  %v369 = vunpack.c.l.b16 %v81
  %v370 = vunpack.c.l.b16 %v82
  %v371 = vunpack.c.l.b16 %v83
  %v372 = vunpack.c.l.b16 %v84
  %v373 = vunpack.c.l.b16 %v85
  %v374 = vunpack.c.l.b16 %v86
  %v375 = vpack.c.b16 %v344, %v343
  %v376 = vpack.c.b16 %v346, %v345
  %v377 = vpack.c.b16 %v348, %v347
  %v378 = vpack.c.b16 %v350, %v349
  %v379 = vpack.c.b16 %v352, %v351
  %v380 = vpack.c.b16 %v354, %v353
  %v381 = vpack.c.b16 %v356, %v355
  %v382 = vpack.c.b16 %v358, %v357
  %v383 = vpack.c.b16 %v360, %v359
  %v384 = vpack.c.b16 %v362, %v361
  %v385 = vpack.c.b16 %v364, %v363
  %v386 = vpack.c.b16 %v366, %v365
  %v387 = vpack.c.b16 %v368, %v367
  %v388 = vpack.c.b16 %v370, %v369
  %v389 = vpack.c.b16 %v372, %v371
  %v390 = vpack.c.b16 %v374, %v373
  %407 = vmatpush.bf16.msra.mxu0 %v382
  %408 = vmatpush.bf16.msra.mxu0 %v381
  %409 = vmatpush.bf16.msra.mxu0 %v380
  %410 = vmatpush.bf16.msra.mxu0 %v379
  %411 = vmatpush.bf16.msra.mxu0 %v378
  %412 = vmatpush.bf16.msra.mxu0 %v377
  %413 = vmatpush.bf16.msra.mxu0 %v376
  %414 = vmatpush.bf16.msra.mxu0 %v375
  %415 = vmatmul.bf16.gmra.mxu0 %v247
  %v416 = vpop.f32.mrf.mxu0
  %v417 = vadd.f32 0.0, %v416
  %v418 = vpop.f32.mrf.mxu0
  %v419 = vadd.f32 0.0, %v418
  %420 = vmatmul.bf16.gmra.mxu0 %v249
  %v421 = vpop.f32.mrf.mxu0
  %v422 = vadd.f32 0.0, %v421
  %v423 = vpop.f32.mrf.mxu0
  %v424 = vadd.f32 0.0, %v423
  %425 = vmatmul.bf16.gmra.mxu0 %v251
  %v426 = vpop.f32.mrf.mxu0
  %v427 = vadd.f32 0.0, %v426
  %v428 = vpop.f32.mrf.mxu0
  %v429 = vadd.f32 0.0, %v428
  %430 = vmatmul.bf16.gmra.mxu0 %v253
  %v431 = vpop.f32.mrf.mxu0
  %v432 = vadd.f32 0.0, %v431
  %v433 = vpop.f32.mrf.mxu0
  %v434 = vadd.f32 0.0, %v433
  %435 = vmatmul.bf16.gmra.mxu0 %v255
  %v436 = vpop.f32.mrf.mxu0
  %v437 = vadd.f32 0.0, %v436
  %v438 = vpop.f32.mrf.mxu0
  %v439 = vadd.f32 0.0, %v438
  %440 = vmatmul.bf16.gmra.mxu0 %v257
  %v441 = vpop.f32.mrf.mxu0
  %v442 = vadd.f32 0.0, %v441
  %v443 = vpop.f32.mrf.mxu0
  %v444 = vadd.f32 0.0, %v443
  %445 = vmatmul.bf16.gmra.mxu0 %v259
  %v446 = vpop.f32.mrf.mxu0
  %v447 = vadd.f32 0.0, %v446
  %v448 = vpop.f32.mrf.mxu0
  %v449 = vadd.f32 0.0, %v448
  %450 = vmatmul.bf16.gmra.mxu0 %v261
  %v451 = vpop.f32.mrf.mxu0
  %v452 = vadd.f32 0.0, %v451
  %v453 = vpop.f32.mrf.mxu0
  %v454 = vadd.f32 0.0, %v453
  %455 = vmatmul.bf16.gmra.mxu0 %v263
  %v456 = vpop.f32.mrf.mxu0
  %v457 = vadd.f32 0.0, %v456
  %v458 = vpop.f32.mrf.mxu0
  %v459 = vadd.f32 0.0, %v458
  %460 = vmatmul.bf16.gmra.mxu0 %v265
  %v461 = vpop.f32.mrf.mxu0
  %v462 = vadd.f32 0.0, %v461
  %v463 = vpop.f32.mrf.mxu0
  %v464 = vadd.f32 0.0, %v463
  %465 = vmatmul.bf16.gmra.mxu0 %v267
  %v466 = vpop.f32.mrf.mxu0
  %v467 = vadd.f32 0.0, %v466
  %v468 = vpop.f32.mrf.mxu0
  %v469 = vadd.f32 0.0, %v468
  %470 = vmatmul.bf16.gmra.mxu0 %v269
  %v471 = vpop.f32.mrf.mxu0
  %v472 = vadd.f32 0.0, %v471
  %v473 = vpop.f32.mrf.mxu0
  %v474 = vadd.f32 0.0, %v473
  %475 = vmatmul.bf16.gmra.mxu0 %v271
  %v476 = vpop.f32.mrf.mxu0
  %v477 = vadd.f32 0.0, %v476
  %v478 = vpop.f32.mrf.mxu0
  %v479 = vadd.f32 0.0, %v478
  %480 = vmatmul.bf16.gmra.mxu0 %v273
  %v481 = vpop.f32.mrf.mxu0
  %v482 = vadd.f32 0.0, %v481
  %v483 = vpop.f32.mrf.mxu0
  %v484 = vadd.f32 0.0, %v483
  %485 = vmatmul.bf16.gmra.mxu0 %v275
  %v486 = vpop.f32.mrf.mxu0
  %v487 = vadd.f32 0.0, %v486
  %v488 = vpop.f32.mrf.mxu0
  %v489 = vadd.f32 0.0, %v488
  %490 = vmatmul.bf16.gmra.mxu0 %v277
  %v491 = vpop.f32.mrf.mxu0
  %v492 = vadd.f32 0.0, %v491
  %v493 = vpop.f32.mrf.mxu0
  %v494 = vadd.f32 0.0, %v493
  %495 = vdwg.mxu0
  %496 = vmatpush.bf16.msra.mxu0 %v390
  %497 = vmatpush.bf16.msra.mxu0 %v389
  %498 = vmatpush.bf16.msra.mxu0 %v388
  %499 = vmatpush.bf16.msra.mxu0 %v387
  %500 = vmatpush.bf16.msra.mxu0 %v386
  %501 = vmatpush.bf16.msra.mxu0 %v385
  %502 = vmatpush.bf16.msra.mxu0 %v384
  %503 = vmatpush.bf16.msra.mxu0 %v383
  %504 = vmatmul.bf16.gmra.mxu0 %v248
  %v505 = vpop.f32.mrf.mxu0
  %v506 = vadd.f32 %v417, %v505
  %v507 = vpop.f32.mrf.mxu0
  %v508 = vadd.f32 %v419, %v507
  %509 = vmatmul.bf16.gmra.mxu0 %v250
  %v510 = vpop.f32.mrf.mxu0
  %v511 = vadd.f32 %v422, %v510
  %v512 = vpop.f32.mrf.mxu0
  %v513 = vadd.f32 %v424, %v512
  %514 = vmatmul.bf16.gmra.mxu0 %v252
  %v515 = vpop.f32.mrf.mxu0
  %v516 = vadd.f32 %v427, %v515
  %v517 = vpop.f32.mrf.mxu0
  %v518 = vadd.f32 %v429, %v517
  %519 = vmatmul.bf16.gmra.mxu0 %v254
  %v520 = vpop.f32.mrf.mxu0
  %v521 = vadd.f32 %v432, %v520
  %v522 = vpop.f32.mrf.mxu0
  %v523 = vadd.f32 %v434, %v522
  %524 = vmatmul.bf16.gmra.mxu0 %v256
  %v525 = vpop.f32.mrf.mxu0
  %v526 = vadd.f32 %v437, %v525
  %v527 = vpop.f32.mrf.mxu0
  %v528 = vadd.f32 %v439, %v527
  %529 = vmatmul.bf16.gmra.mxu0 %v258
  %v530 = vpop.f32.mrf.mxu0
  %v531 = vadd.f32 %v442, %v530
  %v532 = vpop.f32.mrf.mxu0
  %v533 = vadd.f32 %v444, %v532
  %534 = vmatmul.bf16.gmra.mxu0 %v260
  %v535 = vpop.f32.mrf.mxu0
  %v536 = vadd.f32 %v447, %v535
  %v537 = vpop.f32.mrf.mxu0
  %v538 = vadd.f32 %v449, %v537
  %539 = vmatmul.bf16.gmra.mxu0 %v262
  %v540 = vpop.f32.mrf.mxu0
  %v541 = vadd.f32 %v452, %v540
  %v542 = vpop.f32.mrf.mxu0
  %v543 = vadd.f32 %v454, %v542
  %544 = vmatmul.bf16.gmra.mxu0 %v264
  %v545 = vpop.f32.mrf.mxu0
  %v546 = vadd.f32 %v457, %v545
  %v547 = vpop.f32.mrf.mxu0
  %v548 = vadd.f32 %v459, %v547
  %549 = vmatmul.bf16.gmra.mxu0 %v266
  %v550 = vpop.f32.mrf.mxu0
  %v551 = vadd.f32 %v462, %v550
  %v552 = vpop.f32.mrf.mxu0
  %v553 = vadd.f32 %v464, %v552
  %554 = vmatmul.bf16.gmra.mxu0 %v268
  %v555 = vpop.f32.mrf.mxu0
  %v556 = vadd.f32 %v467, %v555
  %v557 = vpop.f32.mrf.mxu0
  %v558 = vadd.f32 %v469, %v557
  %559 = vmatmul.bf16.gmra.mxu0 %v270
  %v560 = vpop.f32.mrf.mxu0
  %v561 = vadd.f32 %v472, %v560
  %v562 = vpop.f32.mrf.mxu0
  %v563 = vadd.f32 %v474, %v562
  %564 = vmatmul.bf16.gmra.mxu0 %v272
  %v565 = vpop.f32.mrf.mxu0
  %v566 = vadd.f32 %v477, %v565
  %v567 = vpop.f32.mrf.mxu0
  %v568 = vadd.f32 %v479, %v567
  %569 = vmatmul.bf16.gmra.mxu0 %v274
  %v570 = vpop.f32.mrf.mxu0
  %v571 = vadd.f32 %v482, %v570
  %v572 = vpop.f32.mrf.mxu0
  %v573 = vadd.f32 %v484, %v572
  %574 = vmatmul.bf16.gmra.mxu0 %v276
  %v575 = vpop.f32.mrf.mxu0
  %v576 = vadd.f32 %v487, %v575
  %v577 = vpop.f32.mrf.mxu0
  %v578 = vadd.f32 %v489, %v577
  %579 = vmatmul.bf16.gmra.mxu0 %v278
  %v580 = vpop.f32.mrf.mxu0
  %v581 = vadd.f32 %v492, %v580
  %v582 = vpop.f32.mrf.mxu0
  %v583 = vadd.f32 %v494, %v582
  %584 = vdwg.mxu0
  %v585 = vadd.f32 %v87, %v506
  %v586 = vadd.f32 %v88, %v508
  %v587 = vadd.f32 %v89, %v511
  %v588 = vadd.f32 %v90, %v513
  %v589 = vadd.f32 %v91, %v516
  %v590 = vadd.f32 %v92, %v518
  %v591 = vadd.f32 %v93, %v521
  %v592 = vadd.f32 %v94, %v523
  %v593 = vadd.f32 %v95, %v526
  %v594 = vadd.f32 %v96, %v528
  %v595 = vadd.f32 %v97, %v531
  %v596 = vadd.f32 %v98, %v533
  %v597 = vadd.f32 %v99, %v536
  %v598 = vadd.f32 %v100, %v538
  %v599 = vadd.f32 %v101, %v541
  %v600 = vadd.f32 %v102, %v543
  %v601 = vadd.f32 %v103, %v546
  %v602 = vadd.f32 %v104, %v548
  %v603 = vadd.f32 %v105, %v551
  %v604 = vadd.f32 %v106, %v553
  %v605 = vadd.f32 %v107, %v556
  %v606 = vadd.f32 %v108, %v558
  %v607 = vadd.f32 %v109, %v561
  %v608 = vadd.f32 %v110, %v563
  %v609 = vadd.f32 %v111, %v566
  %v610 = vadd.f32 %v112, %v568
  %v611 = vadd.f32 %v113, %v571
  %v612 = vadd.f32 %v114, %v573
  %v613 = vadd.f32 %v115, %v576
  %v614 = vadd.f32 %v116, %v578
  %v615 = vadd.f32 %v117, %v581
  %v616 = vadd.f32 %v118, %v583
  %617 = vst [vmem:[#allocation2] sm:$0xff] %v585
  %618 = vst [vmem:[#allocation2 + $0x8] sm:$0xff] %v586
  %619 = vst [vmem:[#allocation2 + $0x10] sm:$0xff] %v587
  %620 = vst [vmem:[#allocation2 + $0x18] sm:$0xff] %v588
  %621 = vst [vmem:[#allocation2 + $0x20] sm:$0xff] %v589
  %622 = vst [vmem:[#allocation2 + $0x28] sm:$0xff] %v590
  %623 = vst [vmem:[#allocation2 + $0x30] sm:$0xff] %v591
  %624 = vst [vmem:[#allocation2 + $0x38] sm:$0xff] %v592
  %625 = vst [vmem:[#allocation2 + $0x40] sm:$0xff] %v593
  %626 = vst [vmem:[#allocation2 + $0x48] sm:$0xff] %v594
  %627 = vst [vmem:[#allocation2 + $0x50] sm:$0xff] %v595
  %628 = vst [vmem:[#allocation2 + $0x58] sm:$0xff] %v596
  %629 = vst [vmem:[#allocation2 + $0x60] sm:$0xff] %v597
  %630 = vst [vmem:[#allocation2 + $0x68] sm:$0xff] %v598
  %631 = vst [vmem:[#allocation2 + $0x70] sm:$0xff] %v599
  %632 = vst [vmem:[#allocation2 + $0x78] sm:$0xff] %v600
  %633 = vst [vmem:[#allocation2 + $0x80] sm:$0xff] %v601
  %634 = vst [vmem:[#allocation2 + $0x88] sm:$0xff] %v602
  %635 = vst [vmem:[#allocation2 + $0x90] sm:$0xff] %v603
  %636 = vst [vmem:[#allocation2 + $0x98] sm:$0xff] %v604
  %637 = vst [vmem:[#allocation2 + $0xa0] sm:$0xff] %v605
  %638 = vst [vmem:[#allocation2 + $0xa8] sm:$0xff] %v606
  %639 = vst [vmem:[#allocation2 + $0xb0] sm:$0xff] %v607
  %640 = vst [vmem:[#allocation2 + $0xb8] sm:$0xff] %v608
  %641 = vst [vmem:[#allocation2 + $0xc0] sm:$0xff] %v609
  %642 = vst [vmem:[#allocation2 + $0xc8] sm:$0xff] %v610
  %643 = vst [vmem:[#allocation2 + $0xd0] sm:$0xff] %v611
  %644 = vst [vmem:[#allocation2 + $0xd8] sm:$0xff] %v612
  %645 = vst [vmem:[#allocation2 + $0xe0] sm:$0xff] %v613
  %646 = vst [vmem:[#allocation2 + $0xe8] sm:$0xff] %v614
  %647 = vst [vmem:[#allocation2 + $0xf0] sm:$0xff] %v615
  %648 = vst [vmem:[#allocation2 + $0xf8] sm:$0xff] %v616
  // Predicated region
  $region18: #{gcn_forward.5} parent=0 // pred_check
    %p649 = pneg %p14
  $region19: #{gcn_forward.5} parent=0 // pred_check_branch
    %651 = sbr.rel (%p649) target = $region21
  $region20: #{gcn_forward.5} parent=0 // pred_region
    %v652 = vld [vmem:[#allocation2] sm:$0xff]
    %v653 = vld [vmem:[#allocation2 + $0x8] sm:$0xff]
    %v654 = vld [vmem:[#allocation2 + $0x10] sm:$0xff]
    %v655 = vld [vmem:[#allocation2 + $0x18] sm:$0xff]
    %v656 = vld [vmem:[#allocation2 + $0x20] sm:$0xff]
    %v657 = vld [vmem:[#allocation2 + $0x28] sm:$0xff]
    %v658 = vld [vmem:[#allocation2 + $0x30] sm:$0xff]
    %v659 = vld [vmem:[#allocation2 + $0x38] sm:$0xff]
    %v660 = vld [vmem:[#allocation2 + $0x40] sm:$0xff]
    %v661 = vld [vmem:[#allocation2 + $0x48] sm:$0xff]
    %v662 = vld [vmem:[#allocation2 + $0x50] sm:$0xff]
    %v663 = vld [vmem:[#allocation2 + $0x58] sm:$0xff]
    %v664 = vld [vmem:[#allocation2 + $0x60] sm:$0xff]
    %v665 = vld [vmem:[#allocation2 + $0x68] sm:$0xff]
    %v666 = vld [vmem:[#allocation2 + $0x70] sm:$0xff]
    %v667 = vld [vmem:[#allocation2 + $0x78] sm:$0xff]
    %v668 = vld [vmem:[#allocation2 + $0x80] sm:$0xff]
    %v669 = vld [vmem:[#allocation2 + $0x88] sm:$0xff]
    %v670 = vld [vmem:[#allocation2 + $0x90] sm:$0xff]
    %v671 = vld [vmem:[#allocation2 + $0x98] sm:$0xff]
    %v672 = vld [vmem:[#allocation2 + $0xa0] sm:$0xff]
    %v673 = vld [vmem:[#allocation2 + $0xa8] sm:$0xff]
    %v674 = vld [vmem:[#allocation2 + $0xb0] sm:$0xff]
    %v675 = vld [vmem:[#allocation2 + $0xb8] sm:$0xff]
    %v676 = vld [vmem:[#allocation2 + $0xc0] sm:$0xff]
    %v677 = vld [vmem:[#allocation2 + $0xc8] sm:$0xff]
    %v678 = vld [vmem:[#allocation2 + $0xd0] sm:$0xff]
    %v679 = vld [vmem:[#allocation2 + $0xd8] sm:$0xff]
    %v680 = vld [vmem:[#allocation2 + $0xe0] sm:$0xff]
    %v681 = vld [vmem:[#allocation2 + $0xe8] sm:$0xff]
    %v682 = vld [vmem:[#allocation2 + $0xf0] sm:$0xff]
    %v683 = vld [vmem:[#allocation2 + $0xf8] sm:$0xff]
    %v684 = vld [vmem:[%s2] sm:$0x1]
    %v686 = vperm.slane %v684, 0
    %v688 = vadd.f32 %v652, %v686
    %v689 = vadd.f32 %v653, %v686
    %v690 = vadd.f32 %v654, %v686
    %v691 = vadd.f32 %v655, %v686
    %v692 = vadd.f32 %v656, %v686
    %v693 = vadd.f32 %v657, %v686
    %v694 = vadd.f32 %v658, %v686
    %v695 = vadd.f32 %v659, %v686
    %v696 = vadd.f32 %v660, %v686
    %v697 = vadd.f32 %v661, %v686
    %v698 = vadd.f32 %v662, %v686
    %v699 = vadd.f32 %v663, %v686
    %v700 = vadd.f32 %v664, %v686
    %v701 = vadd.f32 %v665, %v686
    %v702 = vadd.f32 %v666, %v686
    %v703 = vadd.f32 %v667, %v686
    %v704 = vadd.f32 %v668, %v686
    %v705 = vadd.f32 %v669, %v686
    %v706 = vadd.f32 %v670, %v686
    %v707 = vadd.f32 %v671, %v686
    %v708 = vadd.f32 %v672, %v686
    %v709 = vadd.f32 %v673, %v686
    %v710 = vadd.f32 %v674, %v686
    %v711 = vadd.f32 %v675, %v686
    %v712 = vadd.f32 %v676, %v686
    %v713 = vadd.f32 %v677, %v686
    %v714 = vadd.f32 %v678, %v686
    %v715 = vadd.f32 %v679, %v686
    %v716 = vadd.f32 %v680, %v686
    %v717 = vadd.f32 %v681, %v686
    %v718 = vadd.f32 %v682, %v686
    %v719 = vadd.f32 %v683, %v686
    %v720 = vmax.f32 %v688, 0.0
    %v721 = vmax.f32 %v689, 0.0
    %v722 = vmax.f32 %v690, 0.0
    %v723 = vmax.f32 %v691, 0.0
    %v724 = vmax.f32 %v692, 0.0
    %v725 = vmax.f32 %v693, 0.0
    %v726 = vmax.f32 %v694, 0.0
    %v727 = vmax.f32 %v695, 0.0
    %v728 = vmax.f32 %v696, 0.0
    %v729 = vmax.f32 %v697, 0.0
    %v730 = vmax.f32 %v698, 0.0
    %v731 = vmax.f32 %v699, 0.0
    %v732 = vmax.f32 %v700, 0.0
    %v733 = vmax.f32 %v701, 0.0
    %v734 = vmax.f32 %v702, 0.0
    %v735 = vmax.f32 %v703, 0.0
    %v736 = vmax.f32 %v704, 0.0
    %v737 = vmax.f32 %v705, 0.0
    %v738 = vmax.f32 %v706, 0.0
    %v739 = vmax.f32 %v707, 0.0
    %v740 = vmax.f32 %v708, 0.0
    %v741 = vmax.f32 %v709, 0.0
    %v742 = vmax.f32 %v710, 0.0
    %v743 = vmax.f32 %v711, 0.0
    %v744 = vmax.f32 %v712, 0.0
    %v745 = vmax.f32 %v713, 0.0
    %v746 = vmax.f32 %v714, 0.0
    %v747 = vmax.f32 %v715, 0.0
    %v748 = vmax.f32 %v716, 0.0
    %v749 = vmax.f32 %v717, 0.0
    %v750 = vmax.f32 %v718, 0.0
    %v751 = vmax.f32 %v719, 0.0
    %v752 = vpack.c.bf16 %v720, %v720
    %v753 = vpack.c.bf16 %v721, %v721
    %v754 = vpack.c.bf16 %v722, %v722
    %v755 = vpack.c.bf16 %v723, %v723
    %v756 = vpack.c.bf16 %v724, %v724
    %v757 = vpack.c.bf16 %v725, %v725
    %v758 = vpack.c.bf16 %v726, %v726
    %v759 = vpack.c.bf16 %v727, %v727
    %v760 = vpack.c.bf16 %v728, %v728
    %v761 = vpack.c.bf16 %v729, %v729
    %v762 = vpack.c.bf16 %v730, %v730
    %v763 = vpack.c.bf16 %v731, %v731
    %v764 = vpack.c.bf16 %v732, %v732
    %v765 = vpack.c.bf16 %v733, %v733
    %v766 = vpack.c.bf16 %v734, %v734
    %v767 = vpack.c.bf16 %v735, %v735
    %v768 = vpack.c.bf16 %v736, %v736
    %v769 = vpack.c.bf16 %v737, %v737
    %v770 = vpack.c.bf16 %v738, %v738
    %v771 = vpack.c.bf16 %v739, %v739
    %v772 = vpack.c.bf16 %v740, %v740
    %v773 = vpack.c.bf16 %v741, %v741
    %v774 = vpack.c.bf16 %v742, %v742
    %v775 = vpack.c.bf16 %v743, %v743
    %v776 = vpack.c.bf16 %v744, %v744
    %v777 = vpack.c.bf16 %v745, %v745
    %v778 = vpack.c.bf16 %v746, %v746
    %v779 = vpack.c.bf16 %v747, %v747
    %v780 = vpack.c.bf16 %v748, %v748
    %v781 = vpack.c.bf16 %v749, %v749
    %v782 = vpack.c.bf16 %v750, %v750
    %v783 = vpack.c.bf16 %v751, %v751
    %784 = vst [vmem:[%s3] sm:$0xf] %v752
    %785 = vst [vmem:[%s3 + $0x4] sm:$0xf] %v753
    %786 = vst [vmem:[%s3 + $0x8] sm:$0xf] %v754
    %787 = vst [vmem:[%s3 + $0xc] sm:$0xf] %v755
    %788 = vst [vmem:[%s3 + $0x10] sm:$0xf] %v756
    %789 = vst [vmem:[%s3 + $0x14] sm:$0xf] %v757
    %790 = vst [vmem:[%s3 + $0x18] sm:$0xf] %v758
    %791 = vst [vmem:[%s3 + $0x1c] sm:$0xf] %v759
    %792 = vst [vmem:[%s3 + $0x20] sm:$0xf] %v760
    %793 = vst [vmem:[%s3 + $0x24] sm:$0xf] %v761
    %794 = vst [vmem:[%s3 + $0x28] sm:$0xf] %v762
    %795 = vst [vmem:[%s3 + $0x2c] sm:$0xf] %v763
    %796 = vst [vmem:[%s3 + $0x30] sm:$0xf] %v764
    %797 = vst [vmem:[%s3 + $0x34] sm:$0xf] %v765
    %798 = vst [vmem:[%s3 + $0x38] sm:$0xf] %v766
    %799 = vst [vmem:[%s3 + $0x3c] sm:$0xf] %v767
    %800 = vst [vmem:[%s3 + $0x40] sm:$0xf] %v768
    %801 = vst [vmem:[%s3 + $0x44] sm:$0xf] %v769
    %802 = vst [vmem:[%s3 + $0x48] sm:$0xf] %v770
    %803 = vst [vmem:[%s3 + $0x4c] sm:$0xf] %v771
    %804 = vst [vmem:[%s3 + $0x50] sm:$0xf] %v772
    %805 = vst [vmem:[%s3 + $0x54] sm:$0xf] %v773
    %806 = vst [vmem:[%s3 + $0x58] sm:$0xf] %v774
    %807 = vst [vmem:[%s3 + $0x5c] sm:$0xf] %v775
    %808 = vst [vmem:[%s3 + $0x60] sm:$0xf] %v776
    %809 = vst [vmem:[%s3 + $0x64] sm:$0xf] %v777
    %810 = vst [vmem:[%s3 + $0x68] sm:$0xf] %v778
    %811 = vst [vmem:[%s3 + $0x6c] sm:$0xf] %v779
    %812 = vst [vmem:[%s3 + $0x70] sm:$0xf] %v780
    %813 = vst [vmem:[%s3 + $0x74] sm:$0xf] %v781
    %814 = vst [vmem:[%s3 + $0x78] sm:$0xf] %v782
    %815 = vst [vmem:[%s3 + $0x7c] sm:$0xf] %v783
  $region21: #{gcn_forward.5} parent=0 // pred_fallthru
    _
  // Predicated region
  $region22: #{gcn_forward.5} parent=0 // pred_check
    _
  $region23: #{gcn_forward.5} parent=0 // pred_check_branch
    %817 = sbr.rel (0) target = $region25
  $region24: #{gcn_forward.5} parent=0 // pred_region
    _
  $region25: #{gcn_forward.5} parent=0 // pred_fallthru
    _
  // Predicated region
  $region26: #{gcn_forward.5} parent=0 // pred_check
    _
  $region27: #{gcn_forward.5} parent=0 // pred_check_branch
    %819 = sbr.rel (0) target = $region29
  $region28: #{gcn_forward.5} parent=0 // pred_region
    _
  $region29: #{gcn_forward.5} parent=0 // pred_fallthru
    _

// kernel: gcn_forward.7
$region0: #{gcn_forward.7}
  #allocation0 [shape = 'u32[]', space=smem, size = 0x4, offset = 0x4, fixed_abs, tag = 'smem constant byte address 0x4 - core index']
  #allocation1 [shape = 'u32[72,128]{1,0:T(1,128)}', space=vmem, size = 0x9000, scoped, tag = 'internal scratch']
  %s0 = inlined_call_operand.vmem [shape: bf16[256,256], index: 0, kind: input, shape index: {}]
  %s1 = inlined_call_operand.vmem [shape: bf16[256,128], index: 1, kind: input, shape index: {}]
  %s2 = inlined_call_operand.vmem [shape: f32[1,128], index: 2, kind: input, shape index: {}]
  %s3 = inlined_call_operand.vmem [shape: f32[256,128], index: 3, kind: output, shape index: {}]
  %s4 = sld [smem:[#allocation0]]
  $region30: #{gcn_forward.7} parent=0
    _
  %s6 = ssub.s32 1, %s4
  %s7 = scalar_select 0, %s6, %s4
  // Predicated region
  $region2: #{gcn_forward.7} parent=0 // pred_check
    _
  $region3: #{gcn_forward.7} parent=0 // pred_check_branch
    %9 = sbr.rel (0) target = $region5
  $region4: #{gcn_forward.7} parent=0 // pred_region
    _
  $region5: #{gcn_forward.7} parent=0 // pred_fallthru
    _
  // Predicated region
  $region6: #{gcn_forward.7} parent=0 // pred_check
    _
  $region7: #{gcn_forward.7} parent=0 // pred_check_branch
    %11 = sbr.rel (0) target = $region9
  $region8: #{gcn_forward.7} parent=0 // pred_region
    _
  $region9: #{gcn_forward.7} parent=0 // pred_fallthru
    _
  // Predicated region
  $region10: #{gcn_forward.7} parent=0 // pred_check
    _
  $region11: #{gcn_forward.7} parent=0 // pred_check_branch
    %13 = sbr.rel (0) target = $region13
  $region12: #{gcn_forward.7} parent=0 // pred_region
    _
  $region13: #{gcn_forward.7} parent=0 // pred_fallthru
    _
  %p14 = scmp.eq.s32.totalorder 0, 0
  // Predicated region
  $region14: #{gcn_forward.7} parent=0 // pred_check
    %p15 = pneg %p14
  $region15: #{gcn_forward.7} parent=0 // pred_check_branch
    %17 = sbr.rel (%p15) target = $region17
  $region16: #{gcn_forward.7} parent=0 // pred_region
    %18 = vst [vmem:[%s3] sm:$0xff] 0.0
    %19 = vst [vmem:[%s3 + $0x8] sm:$0xff] 0.0
    %20 = vst [vmem:[%s3 + $0x10] sm:$0xff] 0.0
    %21 = vst [vmem:[%s3 + $0x18] sm:$0xff] 0.0
    %22 = vst [vmem:[%s3 + $0x20] sm:$0xff] 0.0
    %23 = vst [vmem:[%s3 + $0x28] sm:$0xff] 0.0
    %24 = vst [vmem:[%s3 + $0x30] sm:$0xff] 0.0
    %25 = vst [vmem:[%s3 + $0x38] sm:$0xff] 0.0
    %26 = vst [vmem:[%s3 + $0x40] sm:$0xff] 0.0
    %27 = vst [vmem:[%s3 + $0x48] sm:$0xff] 0.0
    %28 = vst [vmem:[%s3 + $0x50] sm:$0xff] 0.0
    %29 = vst [vmem:[%s3 + $0x58] sm:$0xff] 0.0
    %30 = vst [vmem:[%s3 + $0x60] sm:$0xff] 0.0
    %31 = vst [vmem:[%s3 + $0x68] sm:$0xff] 0.0
    %32 = vst [vmem:[%s3 + $0x70] sm:$0xff] 0.0
    %33 = vst [vmem:[%s3 + $0x78] sm:$0xff] 0.0
    %34 = vst [vmem:[%s3 + $0x80] sm:$0xff] 0.0
    %35 = vst [vmem:[%s3 + $0x88] sm:$0xff] 0.0
    %36 = vst [vmem:[%s3 + $0x90] sm:$0xff] 0.0
    %37 = vst [vmem:[%s3 + $0x98] sm:$0xff] 0.0
    %38 = vst [vmem:[%s3 + $0xa0] sm:$0xff] 0.0
    %39 = vst [vmem:[%s3 + $0xa8] sm:$0xff] 0.0
    %40 = vst [vmem:[%s3 + $0xb0] sm:$0xff] 0.0
    %41 = vst [vmem:[%s3 + $0xb8] sm:$0xff] 0.0
    %42 = vst [vmem:[%s3 + $0xc0] sm:$0xff] 0.0
    %43 = vst [vmem:[%s3 + $0xc8] sm:$0xff] 0.0
    %44 = vst [vmem:[%s3 + $0xd0] sm:$0xff] 0.0
    %45 = vst [vmem:[%s3 + $0xd8] sm:$0xff] 0.0
    %46 = vst [vmem:[%s3 + $0xe0] sm:$0xff] 0.0
    %47 = vst [vmem:[%s3 + $0xe8] sm:$0xff] 0.0
    %48 = vst [vmem:[%s3 + $0xf0] sm:$0xff] 0.0
    %49 = vst [vmem:[%s3 + $0xf8] sm:$0xff] 0.0
  $region17: #{gcn_forward.7} parent=0 // pred_fallthru
    _
  %s50 = smul.u32 0, 256
  %s51 = sshra.s32 %s50, 3
  %s52 = sand.u32 %s50, 7
  %s53 = smul.addr %s51, 4
  %s54 = scalar_lea.vmem %s1, %s53
  %v55 = vld [vmem:[%s54] sm:$0xf]
  %v56 = vld [vmem:[%s54 + $0x4] sm:$0xf]
  %v57 = vld [vmem:[%s54 + $0x8] sm:$0xf]
  %v58 = vld [vmem:[%s54 + $0xc] sm:$0xf]
  %v59 = vld [vmem:[%s54 + $0x10] sm:$0xf]
  %v60 = vld [vmem:[%s54 + $0x14] sm:$0xf]
  %v61 = vld [vmem:[%s54 + $0x18] sm:$0xf]
  %v62 = vld [vmem:[%s54 + $0x1c] sm:$0xf]
  %v63 = vld [vmem:[%s54 + $0x20] sm:$0xf]
  %v64 = vld [vmem:[%s54 + $0x24] sm:$0xf]
  %v65 = vld [vmem:[%s54 + $0x28] sm:$0xf]
  %v66 = vld [vmem:[%s54 + $0x2c] sm:$0xf]
  %v67 = vld [vmem:[%s54 + $0x30] sm:$0xf]
  %v68 = vld [vmem:[%s54 + $0x34] sm:$0xf]
  %v69 = vld [vmem:[%s54 + $0x38] sm:$0xf]
  %v70 = vld [vmem:[%s54 + $0x3c] sm:$0xf]
  %v71 = vld [vmem:[%s54 + $0x40] sm:$0xf]
  %v72 = vld [vmem:[%s54 + $0x44] sm:$0xf]
  %v73 = vld [vmem:[%s54 + $0x48] sm:$0xf]
  %v74 = vld [vmem:[%s54 + $0x4c] sm:$0xf]
  %v75 = vld [vmem:[%s54 + $0x50] sm:$0xf]
  %v76 = vld [vmem:[%s54 + $0x54] sm:$0xf]
  %v77 = vld [vmem:[%s54 + $0x58] sm:$0xf]
  %v78 = vld [vmem:[%s54 + $0x5c] sm:$0xf]
  %v79 = vld [vmem:[%s54 + $0x60] sm:$0xf]
  %v80 = vld [vmem:[%s54 + $0x64] sm:$0xf]
  %v81 = vld [vmem:[%s54 + $0x68] sm:$0xf]
  %v82 = vld [vmem:[%s54 + $0x6c] sm:$0xf]
  %v83 = vld [vmem:[%s54 + $0x70] sm:$0xf]
  %v84 = vld [vmem:[%s54 + $0x74] sm:$0xf]
  %v85 = vld [vmem:[%s54 + $0x78] sm:$0xf]
  %v86 = vld [vmem:[%s54 + $0x7c] sm:$0xf]
  %v87 = vld [vmem:[%s3] sm:$0xff]
  %v88 = vld [vmem:[%s3 + $0x8] sm:$0xff]
  %v89 = vld [vmem:[%s3 + $0x10] sm:$0xff]
  %v90 = vld [vmem:[%s3 + $0x18] sm:$0xff]
  %v91 = vld [vmem:[%s3 + $0x20] sm:$0xff]
  %v92 = vld [vmem:[%s3 + $0x28] sm:$0xff]
  %v93 = vld [vmem:[%s3 + $0x30] sm:$0xff]
  %v94 = vld [vmem:[%s3 + $0x38] sm:$0xff]
  %v95 = vld [vmem:[%s3 + $0x40] sm:$0xff]
  %v96 = vld [vmem:[%s3 + $0x48] sm:$0xff]
  %v97 = vld [vmem:[%s3 + $0x50] sm:$0xff]
  %v98 = vld [vmem:[%s3 + $0x58] sm:$0xff]
  %v99 = vld [vmem:[%s3 + $0x60] sm:$0xff]
  %v100 = vld [vmem:[%s3 + $0x68] sm:$0xff]
  %v101 = vld [vmem:[%s3 + $0x70] sm:$0xff]
  %v102 = vld [vmem:[%s3 + $0x78] sm:$0xff]
  %v103 = vld [vmem:[%s3 + $0x80] sm:$0xff]
  %v104 = vld [vmem:[%s3 + $0x88] sm:$0xff]
  %v105 = vld [vmem:[%s3 + $0x90] sm:$0xff]
  %v106 = vld [vmem:[%s3 + $0x98] sm:$0xff]
  %v107 = vld [vmem:[%s3 + $0xa0] sm:$0xff]
  %v108 = vld [vmem:[%s3 + $0xa8] sm:$0xff]
  %v109 = vld [vmem:[%s3 + $0xb0] sm:$0xff]
  %v110 = vld [vmem:[%s3 + $0xb8] sm:$0xff]
  %v111 = vld [vmem:[%s3 + $0xc0] sm:$0xff]
  %v112 = vld [vmem:[%s3 + $0xc8] sm:$0xff]
  %v113 = vld [vmem:[%s3 + $0xd0] sm:$0xff]
  %v114 = vld [vmem:[%s3 + $0xd8] sm:$0xff]
  %v115 = vld [vmem:[%s3 + $0xe0] sm:$0xff]
  %v116 = vld [vmem:[%s3 + $0xe8] sm:$0xff]
  %v117 = vld [vmem:[%s3 + $0xf0] sm:$0xff]
  %v118 = vld [vmem:[%s3 + $0xf8] sm:$0xff]
  %v119 = vld [vmem:[%s0] sm:$0xff]
  %v120 = vld [vmem:[%s0 + $0x8] sm:$0xff]
  %v121 = vld [vmem:[%s0 + $0x10] sm:$0xff]
  %v122 = vld [vmem:[%s0 + $0x18] sm:$0xff]
  %v123 = vld [vmem:[%s0 + $0x20] sm:$0xff]
  %v124 = vld [vmem:[%s0 + $0x28] sm:$0xff]
  %v125 = vld [vmem:[%s0 + $0x30] sm:$0xff]
  %v126 = vld [vmem:[%s0 + $0x38] sm:$0xff]
  %v127 = vld [vmem:[%s0 + $0x40] sm:$0xff]
  %v128 = vld [vmem:[%s0 + $0x48] sm:$0xff]
  %v129 = vld [vmem:[%s0 + $0x50] sm:$0xff]
  %v130 = vld [vmem:[%s0 + $0x58] sm:$0xff]
  %v131 = vld [vmem:[%s0 + $0x60] sm:$0xff]
  %v132 = vld [vmem:[%s0 + $0x68] sm:$0xff]
  %v133 = vld [vmem:[%s0 + $0x70] sm:$0xff]
  %v134 = vld [vmem:[%s0 + $0x78] sm:$0xff]
  %v135 = vld [vmem:[%s0 + $0x80] sm:$0xff]
  %v136 = vld [vmem:[%s0 + $0x88] sm:$0xff]
  %v137 = vld [vmem:[%s0 + $0x90] sm:$0xff]
  %v138 = vld [vmem:[%s0 + $0x98] sm:$0xff]
  %v139 = vld [vmem:[%s0 + $0xa0] sm:$0xff]
  %v140 = vld [vmem:[%s0 + $0xa8] sm:$0xff]
  %v141 = vld [vmem:[%s0 + $0xb0] sm:$0xff]
  %v142 = vld [vmem:[%s0 + $0xb8] sm:$0xff]
  %v143 = vld [vmem:[%s0 + $0xc0] sm:$0xff]
  %v144 = vld [vmem:[%s0 + $0xc8] sm:$0xff]
  %v145 = vld [vmem:[%s0 + $0xd0] sm:$0xff]
  %v146 = vld [vmem:[%s0 + $0xd8] sm:$0xff]
  %v147 = vld [vmem:[%s0 + $0xe0] sm:$0xff]
  %v148 = vld [vmem:[%s0 + $0xe8] sm:$0xff]
  %v149 = vld [vmem:[%s0 + $0xf0] sm:$0xff]
  %v150 = vld [vmem:[%s0 + $0xf8] sm:$0xff]
  %v183 = vunpack.c.l.b16 %v119
  %v184 = vunpack.c.h.b16 %v119
  %v185 = vunpack.c.l.b16 %v120
  %v186 = vunpack.c.h.b16 %v120
  %v187 = vunpack.c.l.b16 %v121
  %v188 = vunpack.c.h.b16 %v121
  %v189 = vunpack.c.l.b16 %v122
  %v190 = vunpack.c.h.b16 %v122
  %v191 = vunpack.c.l.b16 %v123
  %v192 = vunpack.c.h.b16 %v123
  %v193 = vunpack.c.l.b16 %v124
  %v194 = vunpack.c.h.b16 %v124
  %v195 = vunpack.c.l.b16 %v125
  %v196 = vunpack.c.h.b16 %v125
  %v197 = vunpack.c.l.b16 %v126
  %v198 = vunpack.c.h.b16 %v126
  %v199 = vunpack.c.l.b16 %v127
  %v200 = vunpack.c.h.b16 %v127
  %v201 = vunpack.c.l.b16 %v128
  %v202 = vunpack.c.h.b16 %v128
  %v203 = vunpack.c.l.b16 %v129
  %v204 = vunpack.c.h.b16 %v129
  %v205 = vunpack.c.l.b16 %v130
  %v206 = vunpack.c.h.b16 %v130
  %v207 = vunpack.c.l.b16 %v131
  %v208 = vunpack.c.h.b16 %v131
  %v209 = vunpack.c.l.b16 %v132
  %v210 = vunpack.c.h.b16 %v132
  %v211 = vunpack.c.l.b16 %v133
  %v212 = vunpack.c.h.b16 %v133
  %v213 = vunpack.c.l.b16 %v134
  %v214 = vunpack.c.h.b16 %v134
  %v215 = vunpack.c.l.b16 %v135
  %v216 = vunpack.c.h.b16 %v135
  %v217 = vunpack.c.l.b16 %v136
  %v218 = vunpack.c.h.b16 %v136
  %v219 = vunpack.c.l.b16 %v137
  %v220 = vunpack.c.h.b16 %v137
  %v221 = vunpack.c.l.b16 %v138
  %v222 = vunpack.c.h.b16 %v138
  %v223 = vunpack.c.l.b16 %v139
  %v224 = vunpack.c.h.b16 %v139
  %v225 = vunpack.c.l.b16 %v140
  %v226 = vunpack.c.h.b16 %v140
  %v227 = vunpack.c.l.b16 %v141
  %v228 = vunpack.c.h.b16 %v141
  %v229 = vunpack.c.l.b16 %v142
  %v230 = vunpack.c.h.b16 %v142
  %v231 = vunpack.c.l.b16 %v143
  %v232 = vunpack.c.h.b16 %v143
  %v233 = vunpack.c.l.b16 %v144
  %v234 = vunpack.c.h.b16 %v144
  %v235 = vunpack.c.l.b16 %v145
  %v236 = vunpack.c.h.b16 %v145
  %v237 = vunpack.c.l.b16 %v146
  %v238 = vunpack.c.h.b16 %v146
  %v239 = vunpack.c.l.b16 %v147
  %v240 = vunpack.c.h.b16 %v147
  %v241 = vunpack.c.l.b16 %v148
  %v242 = vunpack.c.h.b16 %v148
  %v243 = vunpack.c.l.b16 %v149
  %v244 = vunpack.c.h.b16 %v149
  %v245 = vunpack.c.l.b16 %v150
  %v246 = vunpack.c.h.b16 %v150
  %v247 = vpack.c.b16 %v185, %v183
  %v248 = vpack.c.b16 %v186, %v184
  %v249 = vpack.c.b16 %v189, %v187
  %v250 = vpack.c.b16 %v190, %v188
  %v251 = vpack.c.b16 %v193, %v191
  %v252 = vpack.c.b16 %v194, %v192
  %v253 = vpack.c.b16 %v197, %v195
  %v254 = vpack.c.b16 %v198, %v196
  %v255 = vpack.c.b16 %v201, %v199
  %v256 = vpack.c.b16 %v202, %v200
  %v257 = vpack.c.b16 %v205, %v203
  %v258 = vpack.c.b16 %v206, %v204
  %v259 = vpack.c.b16 %v209, %v207
  %v260 = vpack.c.b16 %v210, %v208
  %v261 = vpack.c.b16 %v213, %v211
  %v262 = vpack.c.b16 %v214, %v212
  %v263 = vpack.c.b16 %v217, %v215
  %v264 = vpack.c.b16 %v218, %v216
  %v265 = vpack.c.b16 %v221, %v219
  %v266 = vpack.c.b16 %v222, %v220
  %v267 = vpack.c.b16 %v225, %v223
  %v268 = vpack.c.b16 %v226, %v224
  %v269 = vpack.c.b16 %v229, %v227
  %v270 = vpack.c.b16 %v230, %v228
  %v271 = vpack.c.b16 %v233, %v231
  %v272 = vpack.c.b16 %v234, %v232
  %v273 = vpack.c.b16 %v237, %v235
  %v274 = vpack.c.b16 %v238, %v236
  %v275 = vpack.c.b16 %v241, %v239
  %v276 = vpack.c.b16 %v242, %v240
  %v277 = vpack.c.b16 %v245, %v243
  %v278 = vpack.c.b16 %v246, %v244
  %v343 = vunpack.c.l.b16 %v55
  %v344 = vunpack.c.l.b16 %v56
  %v345 = vunpack.c.l.b16 %v57
  %v346 = vunpack.c.l.b16 %v58
  %v347 = vunpack.c.l.b16 %v59
  %v348 = vunpack.c.l.b16 %v60
  %v349 = vunpack.c.l.b16 %v61
  %v350 = vunpack.c.l.b16 %v62
  %v351 = vunpack.c.l.b16 %v63
  %v352 = vunpack.c.l.b16 %v64
  %v353 = vunpack.c.l.b16 %v65
  %v354 = vunpack.c.l.b16 %v66
  %v355 = vunpack.c.l.b16 %v67
  %v356 = vunpack.c.l.b16 %v68
  %v357 = vunpack.c.l.b16 %v69
  %v358 = vunpack.c.l.b16 %v70
  %v359 = vunpack.c.l.b16 %v71
  %v360 = vunpack.c.l.b16 %v72
  %v361 = vunpack.c.l.b16 %v73
  %v362 = vunpack.c.l.b16 %v74
  %v363 = vunpack.c.l.b16 %v75
  %v364 = vunpack.c.l.b16 %v76
  %v365 = vunpack.c.l.b16 %v77
  %v366 = vunpack.c.l.b16 %v78
  %v367 = vunpack.c.l.b16 %v79
  %v368 = vunpack.c.l.b16 %v80
  %v369 = vunpack.c.l.b16 %v81
  %v370 = vunpack.c.l.b16 %v82
  %v371 = vunpack.c.l.b16 %v83
  %v372 = vunpack.c.l.b16 %v84
  %v373 = vunpack.c.l.b16 %v85
  %v374 = vunpack.c.l.b16 %v86
  %v375 = vpack.c.b16 %v344, %v343
  %v376 = vpack.c.b16 %v346, %v345
  %v377 = vpack.c.b16 %v348, %v347
  %v378 = vpack.c.b16 %v350, %v349
  %v379 = vpack.c.b16 %v352, %v351
  %v380 = vpack.c.b16 %v354, %v353
  %v381 = vpack.c.b16 %v356, %v355
  %v382 = vpack.c.b16 %v358, %v357
  %v383 = vpack.c.b16 %v360, %v359
  %v384 = vpack.c.b16 %v362, %v361
  %v385 = vpack.c.b16 %v364, %v363
  %v386 = vpack.c.b16 %v366, %v365
  %v387 = vpack.c.b16 %v368, %v367
  %v388 = vpack.c.b16 %v370, %v369
  %v389 = vpack.c.b16 %v372, %v371
  %v390 = vpack.c.b16 %v374, %v373
  %407 = vmatpush.bf16.msra.mxu0 %v382
  %408 = vmatpush.bf16.msra.mxu0 %v381
  %409 = vmatpush.bf16.msra.mxu0 %v380
  %410 = vmatpush.bf16.msra.mxu0 %v379
  %411 = vmatpush.bf16.msra.mxu0 %v378
  %412 = vmatpush.bf16.msra.mxu0 %v377
  %413 = vmatpush.bf16.msra.mxu0 %v376
  %414 = vmatpush.bf16.msra.mxu0 %v375
  %415 = vmatmul.bf16.gmra.mxu0 %v247
  %v416 = vpop.f32.mrf.mxu0
  %v417 = vadd.f32 0.0, %v416
  %v418 = vpop.f32.mrf.mxu0
  %v419 = vadd.f32 0.0, %v418
  %420 = vmatmul.bf16.gmra.mxu0 %v249
  %v421 = vpop.f32.mrf.mxu0
  %v422 = vadd.f32 0.0, %v421
  %v423 = vpop.f32.mrf.mxu0
  %v424 = vadd.f32 0.0, %v423
  %425 = vmatmul.bf16.gmra.mxu0 %v251
  %v426 = vpop.f32.mrf.mxu0
  %v427 = vadd.f32 0.0, %v426
  %v428 = vpop.f32.mrf.mxu0
  %v429 = vadd.f32 0.0, %v428
  %430 = vmatmul.bf16.gmra.mxu0 %v253
  %v431 = vpop.f32.mrf.mxu0
  %v432 = vadd.f32 0.0, %v431
  %v433 = vpop.f32.mrf.mxu0
  %v434 = vadd.f32 0.0, %v433
  %435 = vmatmul.bf16.gmra.mxu0 %v255
  %v436 = vpop.f32.mrf.mxu0
  %v437 = vadd.f32 0.0, %v436
  %v438 = vpop.f32.mrf.mxu0
  %v439 = vadd.f32 0.0, %v438
  %440 = vmatmul.bf16.gmra.mxu0 %v257
  %v441 = vpop.f32.mrf.mxu0
  %v442 = vadd.f32 0.0, %v441
  %v443 = vpop.f32.mrf.mxu0
  %v444 = vadd.f32 0.0, %v443
  %445 = vmatmul.bf16.gmra.mxu0 %v259
  %v446 = vpop.f32.mrf.mxu0
  %v447 = vadd.f32 0.0, %v446
  %v448 = vpop.f32.mrf.mxu0
  %v449 = vadd.f32 0.0, %v448
  %450 = vmatmul.bf16.gmra.mxu0 %v261
  %v451 = vpop.f32.mrf.mxu0
  %v452 = vadd.f32 0.0, %v451
  %v453 = vpop.f32.mrf.mxu0
  %v454 = vadd.f32 0.0, %v453
  %455 = vmatmul.bf16.gmra.mxu0 %v263
  %v456 = vpop.f32.mrf.mxu0
  %v457 = vadd.f32 0.0, %v456
  %v458 = vpop.f32.mrf.mxu0
  %v459 = vadd.f32 0.0, %v458
  %460 = vmatmul.bf16.gmra.mxu0 %v265
  %v461 = vpop.f32.mrf.mxu0
  %v462 = vadd.f32 0.0, %v461
  %v463 = vpop.f32.mrf.mxu0
  %v464 = vadd.f32 0.0, %v463
  %465 = vmatmul.bf16.gmra.mxu0 %v267
  %v466 = vpop.f32.mrf.mxu0
  %v467 = vadd.f32 0.0, %v466
  %v468 = vpop.f32.mrf.mxu0
  %v469 = vadd.f32 0.0, %v468
  %470 = vmatmul.bf16.gmra.mxu0 %v269
  %v471 = vpop.f32.mrf.mxu0
  %v472 = vadd.f32 0.0, %v471
  %v473 = vpop.f32.mrf.mxu0
  %v474 = vadd.f32 0.0, %v473
  %475 = vmatmul.bf16.gmra.mxu0 %v271
  %v476 = vpop.f32.mrf.mxu0
  %v477 = vadd.f32 0.0, %v476
  %v478 = vpop.f32.mrf.mxu0
  %v479 = vadd.f32 0.0, %v478
  %480 = vmatmul.bf16.gmra.mxu0 %v273
  %v481 = vpop.f32.mrf.mxu0
  %v482 = vadd.f32 0.0, %v481
  %v483 = vpop.f32.mrf.mxu0
  %v484 = vadd.f32 0.0, %v483
  %485 = vmatmul.bf16.gmra.mxu0 %v275
  %v486 = vpop.f32.mrf.mxu0
  %v487 = vadd.f32 0.0, %v486
  %v488 = vpop.f32.mrf.mxu0
  %v489 = vadd.f32 0.0, %v488
  %490 = vmatmul.bf16.gmra.mxu0 %v277
  %v491 = vpop.f32.mrf.mxu0
  %v492 = vadd.f32 0.0, %v491
  %v493 = vpop.f32.mrf.mxu0
  %v494 = vadd.f32 0.0, %v493
  %495 = vdwg.mxu0
  %496 = vmatpush.bf16.msra.mxu0 %v390
  %497 = vmatpush.bf16.msra.mxu0 %v389
  %498 = vmatpush.bf16.msra.mxu0 %v388
  %499 = vmatpush.bf16.msra.mxu0 %v387
  %500 = vmatpush.bf16.msra.mxu0 %v386
  %501 = vmatpush.bf16.msra.mxu0 %v385
  %502 = vmatpush.bf16.msra.mxu0 %v384
  %503 = vmatpush.bf16.msra.mxu0 %v383
  %504 = vmatmul.bf16.gmra.mxu0 %v248
  %v505 = vpop.f32.mrf.mxu0
  %v506 = vadd.f32 %v417, %v505
  %v507 = vpop.f32.mrf.mxu0
  %v508 = vadd.f32 %v419, %v507
  %509 = vmatmul.bf16.gmra.mxu0 %v250
  %v510 = vpop.f32.mrf.mxu0
  %v511 = vadd.f32 %v422, %v510
  %v512 = vpop.f32.mrf.mxu0
  %v513 = vadd.f32 %v424, %v512
  %514 = vmatmul.bf16.gmra.mxu0 %v252
  %v515 = vpop.f32.mrf.mxu0
  %v516 = vadd.f32 %v427, %v515
  %v517 = vpop.f32.mrf.mxu0
  %v518 = vadd.f32 %v429, %v517
  %519 = vmatmul.bf16.gmra.mxu0 %v254
  %v520 = vpop.f32.mrf.mxu0
  %v521 = vadd.f32 %v432, %v520
  %v522 = vpop.f32.mrf.mxu0
  %v523 = vadd.f32 %v434, %v522
  %524 = vmatmul.bf16.gmra.mxu0 %v256
  %v525 = vpop.f32.mrf.mxu0
  %v526 = vadd.f32 %v437, %v525
  %v527 = vpop.f32.mrf.mxu0
  %v528 = vadd.f32 %v439, %v527
  %529 = vmatmul.bf16.gmra.mxu0 %v258
  %v530 = vpop.f32.mrf.mxu0
  %v531 = vadd.f32 %v442, %v530
  %v532 = vpop.f32.mrf.mxu0
  %v533 = vadd.f32 %v444, %v532
  %534 = vmatmul.bf16.gmra.mxu0 %v260
  %v535 = vpop.f32.mrf.mxu0
  %v536 = vadd.f32 %v447, %v535
  %v537 = vpop.f32.mrf.mxu0
  %v538 = vadd.f32 %v449, %v537
  %539 = vmatmul.bf16.gmra.mxu0 %v262
  %v540 = vpop.f32.mrf.mxu0
  %v541 = vadd.f32 %v452, %v540
  %v542 = vpop.f32.mrf.mxu0
  %v543 = vadd.f32 %v454, %v542
  %544 = vmatmul.bf16.gmra.mxu0 %v264
  %v545 = vpop.f32.mrf.mxu0
  %v546 = vadd.f32 %v457, %v545
  %v547 = vpop.f32.mrf.mxu0
  %v548 = vadd.f32 %v459, %v547
  %549 = vmatmul.bf16.gmra.mxu0 %v266
  %v550 = vpop.f32.mrf.mxu0
  %v551 = vadd.f32 %v462, %v550
  %v552 = vpop.f32.mrf.mxu0
  %v553 = vadd.f32 %v464, %v552
  %554 = vmatmul.bf16.gmra.mxu0 %v268
  %v555 = vpop.f32.mrf.mxu0
  %v556 = vadd.f32 %v467, %v555
  %v557 = vpop.f32.mrf.mxu0
  %v558 = vadd.f32 %v469, %v557
  %559 = vmatmul.bf16.gmra.mxu0 %v270
  %v560 = vpop.f32.mrf.mxu0
  %v561 = vadd.f32 %v472, %v560
  %v562 = vpop.f32.mrf.mxu0
  %v563 = vadd.f32 %v474, %v562
  %564 = vmatmul.bf16.gmra.mxu0 %v272
  %v565 = vpop.f32.mrf.mxu0
  %v566 = vadd.f32 %v477, %v565
  %v567 = vpop.f32.mrf.mxu0
  %v568 = vadd.f32 %v479, %v567
  %569 = vmatmul.bf16.gmra.mxu0 %v274
  %v570 = vpop.f32.mrf.mxu0
  %v571 = vadd.f32 %v482, %v570
  %v572 = vpop.f32.mrf.mxu0
  %v573 = vadd.f32 %v484, %v572
  %574 = vmatmul.bf16.gmra.mxu0 %v276
  %v575 = vpop.f32.mrf.mxu0
  %v576 = vadd.f32 %v487, %v575
  %v577 = vpop.f32.mrf.mxu0
  %v578 = vadd.f32 %v489, %v577
  %579 = vmatmul.bf16.gmra.mxu0 %v278
  %v580 = vpop.f32.mrf.mxu0
  %v581 = vadd.f32 %v492, %v580
  %v582 = vpop.f32.mrf.mxu0
  %v583 = vadd.f32 %v494, %v582
  %584 = vdwg.mxu0
  %v585 = vadd.f32 %v87, %v506
  %v586 = vadd.f32 %v88, %v508
  %v587 = vadd.f32 %v89, %v511
  %v588 = vadd.f32 %v90, %v513
  %v589 = vadd.f32 %v91, %v516
  %v590 = vadd.f32 %v92, %v518
  %v591 = vadd.f32 %v93, %v521
  %v592 = vadd.f32 %v94, %v523
  %v593 = vadd.f32 %v95, %v526
  %v594 = vadd.f32 %v96, %v528
  %v595 = vadd.f32 %v97, %v531
  %v596 = vadd.f32 %v98, %v533
  %v597 = vadd.f32 %v99, %v536
  %v598 = vadd.f32 %v100, %v538
  %v599 = vadd.f32 %v101, %v541
  %v600 = vadd.f32 %v102, %v543
  %v601 = vadd.f32 %v103, %v546
  %v602 = vadd.f32 %v104, %v548
  %v603 = vadd.f32 %v105, %v551
  %v604 = vadd.f32 %v106, %v553
  %v605 = vadd.f32 %v107, %v556
  %v606 = vadd.f32 %v108, %v558
  %v607 = vadd.f32 %v109, %v561
  %v608 = vadd.f32 %v110, %v563
  %v609 = vadd.f32 %v111, %v566
  %v610 = vadd.f32 %v112, %v568
  %v611 = vadd.f32 %v113, %v571
  %v612 = vadd.f32 %v114, %v573
  %v613 = vadd.f32 %v115, %v576
  %v614 = vadd.f32 %v116, %v578
  %v615 = vadd.f32 %v117, %v581
  %v616 = vadd.f32 %v118, %v583
  %617 = vst [vmem:[%s3] sm:$0xff] %v585
  %618 = vst [vmem:[%s3 + $0x8] sm:$0xff] %v586
  %619 = vst [vmem:[%s3 + $0x10] sm:$0xff] %v587
  %620 = vst [vmem:[%s3 + $0x18] sm:$0xff] %v588
  %621 = vst [vmem:[%s3 + $0x20] sm:$0xff] %v589
  %622 = vst [vmem:[%s3 + $0x28] sm:$0xff] %v590
  %623 = vst [vmem:[%s3 + $0x30] sm:$0xff] %v591
  %624 = vst [vmem:[%s3 + $0x38] sm:$0xff] %v592
  %625 = vst [vmem:[%s3 + $0x40] sm:$0xff] %v593
  %626 = vst [vmem:[%s3 + $0x48] sm:$0xff] %v594
  %627 = vst [vmem:[%s3 + $0x50] sm:$0xff] %v595
  %628 = vst [vmem:[%s3 + $0x58] sm:$0xff] %v596
  %629 = vst [vmem:[%s3 + $0x60] sm:$0xff] %v597
  %630 = vst [vmem:[%s3 + $0x68] sm:$0xff] %v598
  %631 = vst [vmem:[%s3 + $0x70] sm:$0xff] %v599
  %632 = vst [vmem:[%s3 + $0x78] sm:$0xff] %v600
  %633 = vst [vmem:[%s3 + $0x80] sm:$0xff] %v601
  %634 = vst [vmem:[%s3 + $0x88] sm:$0xff] %v602
  %635 = vst [vmem:[%s3 + $0x90] sm:$0xff] %v603
  %636 = vst [vmem:[%s3 + $0x98] sm:$0xff] %v604
  %637 = vst [vmem:[%s3 + $0xa0] sm:$0xff] %v605
  %638 = vst [vmem:[%s3 + $0xa8] sm:$0xff] %v606
  %639 = vst [vmem:[%s3 + $0xb0] sm:$0xff] %v607
  %640 = vst [vmem:[%s3 + $0xb8] sm:$0xff] %v608
  %641 = vst [vmem:[%s3 + $0xc0] sm:$0xff] %v609
  %642 = vst [vmem:[%s3 + $0xc8] sm:$0xff] %v610
  %643 = vst [vmem:[%s3 + $0xd0] sm:$0xff] %v611
  %644 = vst [vmem:[%s3 + $0xd8] sm:$0xff] %v612
  %645 = vst [vmem:[%s3 + $0xe0] sm:$0xff] %v613
  %646 = vst [vmem:[%s3 + $0xe8] sm:$0xff] %v614
  %647 = vst [vmem:[%s3 + $0xf0] sm:$0xff] %v615
  %648 = vst [vmem:[%s3 + $0xf8] sm:$0xff] %v616
  // Predicated region
  $region18: #{gcn_forward.7} parent=0 // pred_check
    %p649 = pneg %p14
  $region19: #{gcn_forward.7} parent=0 // pred_check_branch
    %651 = sbr.rel (%p649) target = $region21
  $region20: #{gcn_forward.7} parent=0 // pred_region
    %v652 = vld [vmem:[%s3] sm:$0xff]
    %v653 = vld [vmem:[%s3 + $0x8] sm:$0xff]
    %v654 = vld [vmem:[%s3 + $0x10] sm:$0xff]
    %v655 = vld [vmem:[%s3 + $0x18] sm:$0xff]
    %v656 = vld [vmem:[%s3 + $0x20] sm:$0xff]
    %v657 = vld [vmem:[%s3 + $0x28] sm:$0xff]
    %v658 = vld [vmem:[%s3 + $0x30] sm:$0xff]
    %v659 = vld [vmem:[%s3 + $0x38] sm:$0xff]
    %v660 = vld [vmem:[%s3 + $0x40] sm:$0xff]
    %v661 = vld [vmem:[%s3 + $0x48] sm:$0xff]
    %v662 = vld [vmem:[%s3 + $0x50] sm:$0xff]
    %v663 = vld [vmem:[%s3 + $0x58] sm:$0xff]
    %v664 = vld [vmem:[%s3 + $0x60] sm:$0xff]
    %v665 = vld [vmem:[%s3 + $0x68] sm:$0xff]
    %v666 = vld [vmem:[%s3 + $0x70] sm:$0xff]
    %v667 = vld [vmem:[%s3 + $0x78] sm:$0xff]
    %v668 = vld [vmem:[%s3 + $0x80] sm:$0xff]
    %v669 = vld [vmem:[%s3 + $0x88] sm:$0xff]
    %v670 = vld [vmem:[%s3 + $0x90] sm:$0xff]
    %v671 = vld [vmem:[%s3 + $0x98] sm:$0xff]
    %v672 = vld [vmem:[%s3 + $0xa0] sm:$0xff]
    %v673 = vld [vmem:[%s3 + $0xa8] sm:$0xff]
    %v674 = vld [vmem:[%s3 + $0xb0] sm:$0xff]
    %v675 = vld [vmem:[%s3 + $0xb8] sm:$0xff]
    %v676 = vld [vmem:[%s3 + $0xc0] sm:$0xff]
    %v677 = vld [vmem:[%s3 + $0xc8] sm:$0xff]
    %v678 = vld [vmem:[%s3 + $0xd0] sm:$0xff]
    %v679 = vld [vmem:[%s3 + $0xd8] sm:$0xff]
    %v680 = vld [vmem:[%s3 + $0xe0] sm:$0xff]
    %v681 = vld [vmem:[%s3 + $0xe8] sm:$0xff]
    %v682 = vld [vmem:[%s3 + $0xf0] sm:$0xff]
    %v683 = vld [vmem:[%s3 + $0xf8] sm:$0xff]
    %v684 = vld [vmem:[%s2] sm:$0x1]
    %v686 = vperm.slane %v684, 0
    %v688 = vadd.f32 %v652, %v686
    %v689 = vadd.f32 %v653, %v686
    %v690 = vadd.f32 %v654, %v686
    %v691 = vadd.f32 %v655, %v686
    %v692 = vadd.f32 %v656, %v686
    %v693 = vadd.f32 %v657, %v686
    %v694 = vadd.f32 %v658, %v686
    %v695 = vadd.f32 %v659, %v686
    %v696 = vadd.f32 %v660, %v686
    %v697 = vadd.f32 %v661, %v686
    %v698 = vadd.f32 %v662, %v686
    %v699 = vadd.f32 %v663, %v686
    %v700 = vadd.f32 %v664, %v686
    %v701 = vadd.f32 %v665, %v686
    %v702 = vadd.f32 %v666, %v686
    %v703 = vadd.f32 %v667, %v686
    %v704 = vadd.f32 %v668, %v686
    %v705 = vadd.f32 %v669, %v686
    %v706 = vadd.f32 %v670, %v686
    %v707 = vadd.f32 %v671, %v686
    %v708 = vadd.f32 %v672, %v686
    %v709 = vadd.f32 %v673, %v686
    %v710 = vadd.f32 %v674, %v686
    %v711 = vadd.f32 %v675, %v686
    %v712 = vadd.f32 %v676, %v686
    %v713 = vadd.f32 %v677, %v686
    %v714 = vadd.f32 %v678, %v686
    %v715 = vadd.f32 %v679, %v686
    %v716 = vadd.f32 %v680, %v686
    %v717 = vadd.f32 %v681, %v686
    %v718 = vadd.f32 %v682, %v686
    %v719 = vadd.f32 %v683, %v686
    %v720 = vlaneseq
    %v721 = vand.u32 %v720, 127
    %vm722 = vcmp.lt.s32.totalorder %v721, 8
    %v723 = vsel %vm722, %v688, -inf
    %v724 = vsel %vm722, %v689, -inf
    %v725 = vsel %vm722, %v690, -inf
    %v726 = vsel %vm722, %v691, -inf
    %v727 = vsel %vm722, %v692, -inf
    %v728 = vsel %vm722, %v693, -inf
    %v729 = vsel %vm722, %v694, -inf
    %v730 = vsel %vm722, %v695, -inf
    %v731 = vsel %vm722, %v696, -inf
    %v732 = vsel %vm722, %v697, -inf
    %v733 = vsel %vm722, %v698, -inf
    %v734 = vsel %vm722, %v699, -inf
    %v735 = vsel %vm722, %v700, -inf
    %v736 = vsel %vm722, %v701, -inf
    %v737 = vsel %vm722, %v702, -inf
    %v738 = vsel %vm722, %v703, -inf
    %v739 = vsel %vm722, %v704, -inf
    %v740 = vsel %vm722, %v705, -inf
    %v741 = vsel %vm722, %v706, -inf
    %v742 = vsel %vm722, %v707, -inf
    %v743 = vsel %vm722, %v708, -inf
    %v744 = vsel %vm722, %v709, -inf
    %v745 = vsel %vm722, %v710, -inf
    %v746 = vsel %vm722, %v711, -inf
    %v747 = vsel %vm722, %v712, -inf
    %v748 = vsel %vm722, %v713, -inf
    %v749 = vsel %vm722, %v714, -inf
    %v750 = vsel %vm722, %v715, -inf
    %v751 = vsel %vm722, %v716, -inf
    %v752 = vsel %vm722, %v717, -inf
    %v753 = vsel %vm722, %v718, -inf
    %v754 = vsel %vm722, %v719, -inf
    %755 = vmax.xlane.f32.xlu0 %v723
    %v756 = vpop.xlane.xlu0 %755
    %757 = vmax.xlane.f32.xlu0 %v724
    %v758 = vpop.xlane.xlu0 %757
    %759 = vmax.xlane.f32.xlu0 %v725
    %v760 = vpop.xlane.xlu0 %759
    %761 = vmax.xlane.f32.xlu0 %v726
    %v762 = vpop.xlane.xlu0 %761
    %763 = vmax.xlane.f32.xlu0 %v727
    %v764 = vpop.xlane.xlu0 %763
    %765 = vmax.xlane.f32.xlu0 %v728
    %v766 = vpop.xlane.xlu0 %765
    %767 = vmax.xlane.f32.xlu0 %v729
    %v768 = vpop.xlane.xlu0 %767
    %769 = vmax.xlane.f32.xlu0 %v730
    %v770 = vpop.xlane.xlu0 %769
    %771 = vmax.xlane.f32.xlu0 %v731
    %v772 = vpop.xlane.xlu0 %771
    %773 = vmax.xlane.f32.xlu0 %v732
    %v774 = vpop.xlane.xlu0 %773
    %775 = vmax.xlane.f32.xlu0 %v733
    %v776 = vpop.xlane.xlu0 %775
    %777 = vmax.xlane.f32.xlu0 %v734
    %v778 = vpop.xlane.xlu0 %777
    %779 = vmax.xlane.f32.xlu0 %v735
    %v780 = vpop.xlane.xlu0 %779
    %781 = vmax.xlane.f32.xlu0 %v736
    %v782 = vpop.xlane.xlu0 %781
    %783 = vmax.xlane.f32.xlu0 %v737
    %v784 = vpop.xlane.xlu0 %783
    %785 = vmax.xlane.f32.xlu0 %v738
    %v786 = vpop.xlane.xlu0 %785
    %787 = vmax.xlane.f32.xlu0 %v739
    %v788 = vpop.xlane.xlu0 %787
    %789 = vmax.xlane.f32.xlu0 %v740
    %v790 = vpop.xlane.xlu0 %789
    %791 = vmax.xlane.f32.xlu0 %v741
    %v792 = vpop.xlane.xlu0 %791
    %793 = vmax.xlane.f32.xlu0 %v742
    %v794 = vpop.xlane.xlu0 %793
    %795 = vmax.xlane.f32.xlu0 %v743
    %v796 = vpop.xlane.xlu0 %795
    %797 = vmax.xlane.f32.xlu0 %v744
    %v798 = vpop.xlane.xlu0 %797
    %799 = vmax.xlane.f32.xlu0 %v745
    %v800 = vpop.xlane.xlu0 %799
    %801 = vmax.xlane.f32.xlu0 %v746
    %v802 = vpop.xlane.xlu0 %801
    %803 = vmax.xlane.f32.xlu0 %v747
    %v804 = vpop.xlane.xlu0 %803
    %805 = vmax.xlane.f32.xlu0 %v748
    %v806 = vpop.xlane.xlu0 %805
    %807 = vmax.xlane.f32.xlu0 %v749
    %v808 = vpop.xlane.xlu0 %807
    %809 = vmax.xlane.f32.xlu0 %v750
    %v810 = vpop.xlane.xlu0 %809
    %811 = vmax.xlane.f32.xlu0 %v751
    %v812 = vpop.xlane.xlu0 %811
    %813 = vmax.xlane.f32.xlu0 %v752
    %v814 = vpop.xlane.xlu0 %813
    %815 = vmax.xlane.f32.xlu0 %v753
    %v816 = vpop.xlane.xlu0 %815
    %817 = vmax.xlane.f32.xlu0 %v754
    %v818 = vpop.xlane.xlu0 %817
    %v819 = vsub.f32 %v723, %v756
    %v820 = vsub.f32 %v724, %v758
    %v821 = vsub.f32 %v725, %v760
    %v822 = vsub.f32 %v726, %v762
    %v823 = vsub.f32 %v727, %v764
    %v824 = vsub.f32 %v728, %v766
    %v825 = vsub.f32 %v729, %v768
    %v826 = vsub.f32 %v730, %v770
    %v827 = vsub.f32 %v731, %v772
    %v828 = vsub.f32 %v732, %v774
    %v829 = vsub.f32 %v733, %v776
    %v830 = vsub.f32 %v734, %v778
    %v831 = vsub.f32 %v735, %v780
    %v832 = vsub.f32 %v736, %v782
    %v833 = vsub.f32 %v737, %v784
    %v834 = vsub.f32 %v738, %v786
    %v835 = vsub.f32 %v739, %v788
    %v836 = vsub.f32 %v740, %v790
    %v837 = vsub.f32 %v741, %v792
    %v838 = vsub.f32 %v742, %v794
    %v839 = vsub.f32 %v743, %v796
    %v840 = vsub.f32 %v744, %v798
    %v841 = vsub.f32 %v745, %v800
    %v842 = vsub.f32 %v746, %v802
    %v843 = vsub.f32 %v747, %v804
    %v844 = vsub.f32 %v748, %v806
    %v845 = vsub.f32 %v749, %v808
    %v846 = vsub.f32 %v750, %v810
    %v847 = vsub.f32 %v751, %v812
    %v848 = vsub.f32 %v752, %v814
    %v849 = vsub.f32 %v753, %v816
    %v850 = vsub.f32 %v754, %v818
    %v851 = vmul.f32 %v819, 1.442695
    %v852 = vpow.pop %v851
    %v853 = vmul.f32 %v820, 1.442695
    %v854 = vpow.pop %v853
    %v855 = vmul.f32 %v821, 1.442695
    %v856 = vpow.pop %v855
    %v857 = vmul.f32 %v822, 1.442695
    %v858 = vpow.pop %v857
    %v859 = vmul.f32 %v823, 1.442695
    %v860 = vpow.pop %v859
    %v861 = vmul.f32 %v824, 1.442695
    %v862 = vpow.pop %v861
    %v863 = vmul.f32 %v825, 1.442695
    %v864 = vpow.pop %v863
    %v865 = vmul.f32 %v826, 1.442695
    %v866 = vpow.pop %v865
    %v867 = vmul.f32 %v827, 1.442695
    %v868 = vpow.pop %v867
    %v869 = vmul.f32 %v828, 1.442695
    %v870 = vpow.pop %v869
    %v871 = vmul.f32 %v829, 1.442695
    %v872 = vpow.pop %v871
    %v873 = vmul.f32 %v830, 1.442695
    %v874 = vpow.pop %v873
    %v875 = vmul.f32 %v831, 1.442695
    %v876 = vpow.pop %v875
    %v877 = vmul.f32 %v832, 1.442695
    %v878 = vpow.pop %v877
    %v879 = vmul.f32 %v833, 1.442695
    %v880 = vpow.pop %v879
    %v881 = vmul.f32 %v834, 1.442695
    %v882 = vpow.pop %v881
    %v883 = vmul.f32 %v835, 1.442695
    %v884 = vpow.pop %v883
    %v885 = vmul.f32 %v836, 1.442695
    %v886 = vpow.pop %v885
    %v887 = vmul.f32 %v837, 1.442695
    %v888 = vpow.pop %v887
    %v889 = vmul.f32 %v838, 1.442695
    %v890 = vpow.pop %v889
    %v891 = vmul.f32 %v839, 1.442695
    %v892 = vpow.pop %v891
    %v893 = vmul.f32 %v840, 1.442695
    %v894 = vpow.pop %v893
    %v895 = vmul.f32 %v841, 1.442695
    %v896 = vpow.pop %v895
    %v897 = vmul.f32 %v842, 1.442695
    %v898 = vpow.pop %v897
    %v899 = vmul.f32 %v843, 1.442695
    %v900 = vpow.pop %v899
    %v901 = vmul.f32 %v844, 1.442695
    %v902 = vpow.pop %v901
    %v903 = vmul.f32 %v845, 1.442695
    %v904 = vpow.pop %v903
    %v905 = vmul.f32 %v846, 1.442695
    %v906 = vpow.pop %v905
    %v907 = vmul.f32 %v847, 1.442695
    %v908 = vpow.pop %v907
    %v909 = vmul.f32 %v848, 1.442695
    %v910 = vpow.pop %v909
    %v911 = vmul.f32 %v849, 1.442695
    %v912 = vpow.pop %v911
    %v913 = vmul.f32 %v850, 1.442695
    %v914 = vpow.pop %v913
    %915 = vadd.xlane.f32.xlu0 %v852
    %v916 = vpop.xlane.xlu0 %915
    %917 = vadd.xlane.f32.xlu0 %v854
    %v918 = vpop.xlane.xlu0 %917
    %919 = vadd.xlane.f32.xlu0 %v856
    %v920 = vpop.xlane.xlu0 %919
    %921 = vadd.xlane.f32.xlu0 %v858
    %v922 = vpop.xlane.xlu0 %921
    %923 = vadd.xlane.f32.xlu0 %v860
    %v924 = vpop.xlane.xlu0 %923
    %925 = vadd.xlane.f32.xlu0 %v862
    %v926 = vpop.xlane.xlu0 %925
    %927 = vadd.xlane.f32.xlu0 %v864
    %v928 = vpop.xlane.xlu0 %927
    %929 = vadd.xlane.f32.xlu0 %v866
    %v930 = vpop.xlane.xlu0 %929
    %931 = vadd.xlane.f32.xlu0 %v868
    %v932 = vpop.xlane.xlu0 %931
    %933 = vadd.xlane.f32.xlu0 %v870
    %v934 = vpop.xlane.xlu0 %933
    %935 = vadd.xlane.f32.xlu0 %v872
    %v936 = vpop.xlane.xlu0 %935
    %937 = vadd.xlane.f32.xlu0 %v874
    %v938 = vpop.xlane.xlu0 %937
    %939 = vadd.xlane.f32.xlu0 %v876
    %v940 = vpop.xlane.xlu0 %939
    %941 = vadd.xlane.f32.xlu0 %v878
    %v942 = vpop.xlane.xlu0 %941
    %943 = vadd.xlane.f32.xlu0 %v880
    %v944 = vpop.xlane.xlu0 %943
    %945 = vadd.xlane.f32.xlu0 %v882
    %v946 = vpop.xlane.xlu0 %945
    %947 = vadd.xlane.f32.xlu0 %v884
    %v948 = vpop.xlane.xlu0 %947
    %949 = vadd.xlane.f32.xlu0 %v886
    %v950 = vpop.xlane.xlu0 %949
    %951 = vadd.xlane.f32.xlu0 %v888
    %v952 = vpop.xlane.xlu0 %951
    %953 = vadd.xlane.f32.xlu0 %v890
    %v954 = vpop.xlane.xlu0 %953
    %955 = vadd.xlane.f32.xlu0 %v892
    %v956 = vpop.xlane.xlu0 %955
    %957 = vadd.xlane.f32.xlu0 %v894
    %v958 = vpop.xlane.xlu0 %957
    %959 = vadd.xlane.f32.xlu0 %v896
    %v960 = vpop.xlane.xlu0 %959
    %961 = vadd.xlane.f32.xlu0 %v898
    %v962 = vpop.xlane.xlu0 %961
    %963 = vadd.xlane.f32.xlu0 %v900
    %v964 = vpop.xlane.xlu0 %963
    %965 = vadd.xlane.f32.xlu0 %v902
    %v966 = vpop.xlane.xlu0 %965
    %967 = vadd.xlane.f32.xlu0 %v904
    %v968 = vpop.xlane.xlu0 %967
    %969 = vadd.xlane.f32.xlu0 %v906
    %v970 = vpop.xlane.xlu0 %969
    %971 = vadd.xlane.f32.xlu0 %v908
    %v972 = vpop.xlane.xlu0 %971
    %973 = vadd.xlane.f32.xlu0 %v910
    %v974 = vpop.xlane.xlu0 %973
    %975 = vadd.xlane.f32.xlu0 %v912
    %v976 = vpop.xlane.xlu0 %975
    %977 = vadd.xlane.f32.xlu0 %v914
    %v978 = vpop.xlane.xlu0 %977
    %v979 = vlog2.pop %v916
    %v980 = vmul.f32 %v979, 0.6931472
    %v981 = vlog2.pop %v918
    %v982 = vmul.f32 %v981, 0.6931472
    %v983 = vlog2.pop %v920
    %v984 = vmul.f32 %v983, 0.6931472
    %v985 = vlog2.pop %v922
    %v986 = vmul.f32 %v985, 0.6931472
    %v987 = vlog2.pop %v924
    %v988 = vmul.f32 %v987, 0.6931472
    %v989 = vlog2.pop %v926
    %v990 = vmul.f32 %v989, 0.6931472
    %v991 = vlog2.pop %v928
    %v992 = vmul.f32 %v991, 0.6931472
    %v993 = vlog2.pop %v930
    %v994 = vmul.f32 %v993, 0.6931472
    %v995 = vlog2.pop %v932
    %v996 = vmul.f32 %v995, 0.6931472
    %v997 = vlog2.pop %v934
    %v998 = vmul.f32 %v997, 0.6931472
    %v999 = vlog2.pop %v936
    %v1000 = vmul.f32 %v999, 0.6931472
    %v1001 = vlog2.pop %v938
    %v1002 = vmul.f32 %v1001, 0.6931472
    %v1003 = vlog2.pop %v940
    %v1004 = vmul.f32 %v1003, 0.6931472
    %v1005 = vlog2.pop %v942
    %v1006 = vmul.f32 %v1005, 0.6931472
    %v1007 = vlog2.pop %v944
    %v1008 = vmul.f32 %v1007, 0.6931472
    %v1009 = vlog2.pop %v946
    %v1010 = vmul.f32 %v1009, 0.6931472
    %v1011 = vlog2.pop %v948
    %v1012 = vmul.f32 %v1011, 0.6931472
    %v1013 = vlog2.pop %v950
    %v1014 = vmul.f32 %v1013, 0.6931472
    %v1015 = vlog2.pop %v952
    %v1016 = vmul.f32 %v1015, 0.6931472
    %v1017 = vlog2.pop %v954
    %v1018 = vmul.f32 %v1017, 0.6931472
    %v1019 = vlog2.pop %v956
    %v1020 = vmul.f32 %v1019, 0.6931472
    %v1021 = vlog2.pop %v958
    %v1022 = vmul.f32 %v1021, 0.6931472
    %v1023 = vlog2.pop %v960
    %v1024 = vmul.f32 %v1023, 0.6931472
    %v1025 = vlog2.pop %v962
    %v1026 = vmul.f32 %v1025, 0.6931472
    %v1027 = vlog2.pop %v964
    %v1028 = vmul.f32 %v1027, 0.6931472
    %v1029 = vlog2.pop %v966
    %v1030 = vmul.f32 %v1029, 0.6931472
    %v1031 = vlog2.pop %v968
    %v1032 = vmul.f32 %v1031, 0.6931472
    %v1033 = vlog2.pop %v970
    %v1034 = vmul.f32 %v1033, 0.6931472
    %v1035 = vlog2.pop %v972
    %v1036 = vmul.f32 %v1035, 0.6931472
    %v1037 = vlog2.pop %v974
    %v1038 = vmul.f32 %v1037, 0.6931472
    %v1039 = vlog2.pop %v976
    %v1040 = vmul.f32 %v1039, 0.6931472
    %v1041 = vlog2.pop %v978
    %v1042 = vmul.f32 %v1041, 0.6931472
    %v1043 = vsub.f32 %v819, %v980
    %v1044 = vsub.f32 %v820, %v982
    %v1045 = vsub.f32 %v821, %v984
    %v1046 = vsub.f32 %v822, %v986
    %v1047 = vsub.f32 %v823, %v988
    %v1048 = vsub.f32 %v824, %v990
    %v1049 = vsub.f32 %v825, %v992
    %v1050 = vsub.f32 %v826, %v994
    %v1051 = vsub.f32 %v827, %v996
    %v1052 = vsub.f32 %v828, %v998
    %v1053 = vsub.f32 %v829, %v1000
    %v1054 = vsub.f32 %v830, %v1002
    %v1055 = vsub.f32 %v831, %v1004
    %v1056 = vsub.f32 %v832, %v1006
    %v1057 = vsub.f32 %v833, %v1008
    %v1058 = vsub.f32 %v834, %v1010
    %v1059 = vsub.f32 %v835, %v1012
    %v1060 = vsub.f32 %v836, %v1014
    %v1061 = vsub.f32 %v837, %v1016
    %v1062 = vsub.f32 %v838, %v1018
    %v1063 = vsub.f32 %v839, %v1020
    %v1064 = vsub.f32 %v840, %v1022
    %v1065 = vsub.f32 %v841, %v1024
    %v1066 = vsub.f32 %v842, %v1026
    %v1067 = vsub.f32 %v843, %v1028
    %v1068 = vsub.f32 %v844, %v1030
    %v1069 = vsub.f32 %v845, %v1032
    %v1070 = vsub.f32 %v846, %v1034
    %v1071 = vsub.f32 %v847, %v1036
    %v1072 = vsub.f32 %v848, %v1038
    %v1073 = vsub.f32 %v849, %v1040
    %v1074 = vsub.f32 %v850, %v1042
    %v1075 = vsel %vm722, %v1043, 0.0
    %v1076 = vsel %vm722, %v1044, 0.0
    %v1077 = vsel %vm722, %v1045, 0.0
    %v1078 = vsel %vm722, %v1046, 0.0
    %v1079 = vsel %vm722, %v1047, 0.0
    %v1080 = vsel %vm722, %v1048, 0.0
    %v1081 = vsel %vm722, %v1049, 0.0
    %v1082 = vsel %vm722, %v1050, 0.0
    %v1083 = vsel %vm722, %v1051, 0.0
    %v1084 = vsel %vm722, %v1052, 0.0
    %v1085 = vsel %vm722, %v1053, 0.0
    %v1086 = vsel %vm722, %v1054, 0.0
    %v1087 = vsel %vm722, %v1055, 0.0
    %v1088 = vsel %vm722, %v1056, 0.0
    %v1089 = vsel %vm722, %v1057, 0.0
    %v1090 = vsel %vm722, %v1058, 0.0
    %v1091 = vsel %vm722, %v1059, 0.0
    %v1092 = vsel %vm722, %v1060, 0.0
    %v1093 = vsel %vm722, %v1061, 0.0
    %v1094 = vsel %vm722, %v1062, 0.0
    %v1095 = vsel %vm722, %v1063, 0.0
    %v1096 = vsel %vm722, %v1064, 0.0
    %v1097 = vsel %vm722, %v1065, 0.0
    %v1098 = vsel %vm722, %v1066, 0.0
    %v1099 = vsel %vm722, %v1067, 0.0
    %v1100 = vsel %vm722, %v1068, 0.0
    %v1101 = vsel %vm722, %v1069, 0.0
    %v1102 = vsel %vm722, %v1070, 0.0
    %v1103 = vsel %vm722, %v1071, 0.0
    %v1104 = vsel %vm722, %v1072, 0.0
    %v1105 = vsel %vm722, %v1073, 0.0
    %v1106 = vsel %vm722, %v1074, 0.0
    %1107 = vst [vmem:[%s3] sm:$0xff] %v1075
    %1108 = vst [vmem:[%s3 + $0x8] sm:$0xff] %v1076
    %1109 = vst [vmem:[%s3 + $0x10] sm:$0xff] %v1077
    %1110 = vst [vmem:[%s3 + $0x18] sm:$0xff] %v1078
    %1111 = vst [vmem:[%s3 + $0x20] sm:$0xff] %v1079
    %1112 = vst [vmem:[%s3 + $0x28] sm:$0xff] %v1080
    %1113 = vst [vmem:[%s3 + $0x30] sm:$0xff] %v1081
    %1114 = vst [vmem:[%s3 + $0x38] sm:$0xff] %v1082
    %1115 = vst [vmem:[%s3 + $0x40] sm:$0xff] %v1083
    %1116 = vst [vmem:[%s3 + $0x48] sm:$0xff] %v1084
    %1117 = vst [vmem:[%s3 + $0x50] sm:$0xff] %v1085
    %1118 = vst [vmem:[%s3 + $0x58] sm:$0xff] %v1086
    %1119 = vst [vmem:[%s3 + $0x60] sm:$0xff] %v1087
    %1120 = vst [vmem:[%s3 + $0x68] sm:$0xff] %v1088
    %1121 = vst [vmem:[%s3 + $0x70] sm:$0xff] %v1089
    %1122 = vst [vmem:[%s3 + $0x78] sm:$0xff] %v1090
    %1123 = vst [vmem:[%s3 + $0x80] sm:$0xff] %v1091
    %1124 = vst [vmem:[%s3 + $0x88] sm:$0xff] %v1092
    %1125 = vst [vmem:[%s3 + $0x90] sm:$0xff] %v1093
    %1126 = vst [vmem:[%s3 + $0x98] sm:$0xff] %v1094
    %1127 = vst [vmem:[%s3 + $0xa0] sm:$0xff] %v1095
    %1128 = vst [vmem:[%s3 + $0xa8] sm:$0xff] %v1096
    %1129 = vst [vmem:[%s3 + $0xb0] sm:$0xff] %v1097
    %1130 = vst [vmem:[%s3 + $0xb8] sm:$0xff] %v1098
    %1131 = vst [vmem:[%s3 + $0xc0] sm:$0xff] %v1099
    %1132 = vst [vmem:[%s3 + $0xc8] sm:$0xff] %v1100
    %1133 = vst [vmem:[%s3 + $0xd0] sm:$0xff] %v1101
    %1134 = vst [vmem:[%s3 + $0xd8] sm:$0xff] %v1102
    %1135 = vst [vmem:[%s3 + $0xe0] sm:$0xff] %v1103
    %1136 = vst [vmem:[%s3 + $0xe8] sm:$0xff] %v1104
    %1137 = vst [vmem:[%s3 + $0xf0] sm:$0xff] %v1105
    %1138 = vst [vmem:[%s3 + $0xf8] sm:$0xff] %v1106
  $region21: #{gcn_forward.7} parent=0 // pred_fallthru
    _
  // Predicated region
  $region22: #{gcn_forward.7} parent=0 // pred_check
    _
  $region23: #{gcn_forward.7} parent=0 // pred_check_branch
    %1140 = sbr.rel (0) target = $region25
  $region24: #{gcn_forward.7} parent=0 // pred_region
    _
  $region25: #{gcn_forward.7} parent=0 // pred_fallthru
    _
  // Predicated region
  $region26: #{gcn_forward.7} parent=0 // pred_check
    _
  $region27: #{gcn_forward.7} parent=0 // pred_check_branch
    %1142 = sbr.rel (0) target = $region29
  $region28: #{gcn_forward.7} parent=0 // pred_region
    _
  $region29: #{gcn_forward.7} parent=0 // pred_fallthru
    _

</llo_original>
